<compile_context>
chip_gen: v7x
topology: tpu7x:2x2x1
jax: 0.10.0
libtpu: 0.0.40
codegen_flags: <defaults>
</compile_context>

<pallas_src>
import functools
import math

import jax
import jax.numpy as jnp
from jax.experimental import pallas as pl
from jax.experimental.pallas import tpu as pltpu

# ----------------------------- configuration ------------------------------ #
NUM_LEADS = 4
NUM_OUTPUTS = 5
FILTERS = [8, 16, 16]          # net_filter_size   (num_resnet_blks = -1 path)
DOWNS = [1, 2, 2]              # net_downsample_factors
KS = 5                         # kernel_size (odd)
SEQ_LEN = 16
SE_REDUCTION = 4
DONT_USE_SE = False
BATCH = 2
BN_EPS = 1e-5
OUT_PAD = 128                  # lane-dense padded output width (>= NUM_OUTPUTS)
SUBLANE = 8                    # f32 sublane tile
MAX_TILE_B = 128               # batch rows per grid step for large batches
# float32 keeps full fidelity with the PyTorch reference; set to jnp.bfloat16
# on v5e/v6e for ~2x MXU throughput once accuracy is re-validated.
MXU_DTYPE = jnp.float32
# TODO(synk): training-mode dropout RNG not implemented (inference: identity).


def _padding(downsample, kernel_size):
    return max(0, int(math.floor((kernel_size - downsample + 1) / 2)))


# ---------------------- parameter folding (host side) ---------------------- #
def _bn_fold(bn):
    gamma, beta, mean, var = bn
    scale = gamma / jnp.sqrt(var + BN_EPS)
    shift = beta - mean * scale
    return scale, shift


def _tile_channels(vec, L):
    """(C,) per-channel vector -> (1, L*C) flat row (length-major, channels fastest)."""
    C = vec.shape[0]
    return jnp.tile(vec.reshape(1, C), (L, 1)).reshape(1, L * C).astype(jnp.float32)


def _conv_as_matrix(w, L_in, stride, pad, in_layout="lc"):
    """Fold a torch-layout Conv1d weight (C_out, C_in, K) into a dense
    (C_in*L_in, L_out*C_out) matrix acting on flattened activations.

    in_layout 'lc': input flat index = l*C_in + c (length-major, channels fastest)
    in_layout 'cl': input flat index = c*L_in + l (== torch .reshape of (B, C, L))
    """
    C_out, C_in, K = w.shape
    L_out = (L_in + 2 * pad - K) // stride + 1
    l = jnp.arange(L_out)
    k = jnp.arange(K)
    j = jnp.arange(L_in)
    # A[k, l, j] = 1  iff  j == stride*l + k - pad (implicit zero padding else).
    A = (j[None, None, :] ==
         (stride * l[None, :, None] + k[:, None, None] - pad)).astype(jnp.float32)
    Wk = jnp.transpose(w, (2, 1, 0)).astype(jnp.float32)            # (K, C_in, C_out)
    M4 = (A[:, :, :, None, None] * Wk[:, None, None, :, :]).sum(0)  # (L_out, L_in, C_in, C_out)
    if in_layout == "lc":
        M4 = jnp.transpose(M4, (1, 2, 0, 3))                        # (L_in, C_in, L_out, C_out)
    else:  # 'cl'
        M4 = jnp.transpose(M4, (2, 1, 0, 3))                        # (C_in, L_in, L_out, C_out)
    return M4.reshape(C_in * L_in, L_out * C_out), L_out


def _pool_selection(L_in, C, ds):
    """MaxPool1d(ds, stride=ds, ceil_mode=True) as `ds` 0/1 selection matrices
    (L_in*C, L_out*C) plus additive masks (-1e30 for ragged tail positions)."""
    L_out = -(-L_in // ds)
    eye = jnp.eye(C, dtype=jnp.float32)
    j = jnp.arange(L_in)
    Ss, ms = [], []
    for r in range(ds):
        tgt = ds * jnp.arange(L_out) + r
        P = (j[:, None] == tgt[None, :]).astype(jnp.float32)              # (L_in, L_out)
        S = (P[:, None, :, None] * eye[None, :, None, :]).reshape(L_in * C, L_out * C)
        m = jnp.where(tgt < L_in, 0.0, -1e30)
        Ss.append(S)
        ms.append(jnp.tile(m.reshape(L_out, 1), (1, C)).reshape(1, L_out * C))
    return Ss, ms, L_out


def prepare_plan(params, seq_len):
    """Fold every layer into matmul-ready constants (done once, outside jit)."""
    total_ds = math.prod(DOWNS)
    L = -(-seq_len // total_ds) * total_ds          # length after front zero padding
    plan = {}

    # --- stem: Conv1d(num_leads -> F0) with bn1 folded; input is the
    #     channel-major flat vector traces.reshape(B, C*L).
    s1, b1 = _bn_fold(params["bn1"])
    M, L = _conv_as_matrix(params["conv1_w"], L, stride=DOWNS[0],
                           pad=_padding(1, KS), in_layout="cl")
    plan["stem"] = {"M": M * _tile_channels(s1, L), "b": _tile_channels(b1, L)}

    blocks = []
    c_in = FILTERS[0]
    for i, (c_out, ds) in enumerate(zip(FILTERS[1:], DOWNS[1:])):
        p = params["blocks"][i]
        blk = {}
        L_in = L
        # skip path: MaxPool1d(ds, ceil_mode=True) then optional 1x1 conv
        L_skip = L_in
        if ds > 1:
            Ss, ms, L_skip = _pool_selection(L_in, c_in, ds)
            blk["pool"] = {"S": Ss, "m": ms}
        if c_in != c_out:
            M1x1, _ = _conv_as_matrix(p["skip_w"], L_skip, stride=1, pad=0, in_layout="lc")
            blk["skip_conv"] = {"M": M1x1, "b": _tile_channels(p["skip_b"], L_skip)}
        # main path
        if i != 0:  # pre-activation bn1 + relu (+ dropout = id)
            s_pre, b_pre = _bn_fold(p["bn1"])
            blk["pre"] = {"s": _tile_channels(s_pre, L_in), "b": _tile_channels(b_pre, L_in)}
        s2, b2 = _bn_fold(p["bn2"])
        M1, L_mid = _conv_as_matrix(p["conv1_w"], L_in, stride=1,
                                    pad=_padding(1, KS), in_layout="lc")
        blk["conv1"] = {"M": M1 * _tile_channels(s2, L_mid), "b": _tile_channels(b2, L_mid)}
        M2, L_out = _conv_as_matrix(p["conv2_w"], L_mid, stride=ds,
                                    pad=_padding(ds, KS), in_layout="lc")
        blk["conv2"] = {"M": M2, "b": _tile_channels(p["conv2_b"], L_out)}
        assert L_out == L_skip, "main / skip path lengths must match"
        if not DONT_USE_SE:
            eye = jnp.eye(c_out, dtype=jnp.float32)
            blk["se"] = {
                "avg": jnp.tile(eye / L_out, (L_out, 1)),    # (L*C, C)   mean over length
                "w1": p["se_w1_t"].astype(jnp.float32),      # (C, C//r)
                "w2": p["se_w2_t"].astype(jnp.float32),      # (C//r, C)
                "rep": jnp.tile(eye, (1, L_out)),            # (C, L*C)   channel broadcast
            }
        blocks.append(blk)
        c_in, L = c_out, L_out
    plan["blocks"] = blocks

    # --- final bn2 + relu and the linear head (fc weight permuted from torch's
    #     channel-major flatten; zero-padded to OUT_PAD lanes for dense stores).
    s_f, b_f = _bn_fold(params["bn2"])
    W = (params["fc_w"].reshape(NUM_OUTPUTS, c_in, L)
         .transpose(2, 1, 0).reshape(L * c_in, NUM_OUTPUTS)).astype(jnp.float32)
    W_pad = jnp.zeros((L * c_in, OUT_PAD), jnp.float32).at[:, :NUM_OUTPUTS].set(W)
    bias_pad = jnp.zeros((1, OUT_PAD), jnp.float32).at[0, :NUM_OUTPUTS].set(
        params["fc_b"].astype(jnp.float32))
    plan["head"] = {"s": _tile_channels(s_f, L), "b": _tile_channels(b_f, L),
                    "W": W_pad, "bias": bias_pad}
    return plan


def _pack_constants(flat_consts):
    """Pack all (2D) constants into one contiguous f32 buffer.

    Each piece is placed at an 8-sublane-aligned row offset and zero-padded to
    a common lane-aligned width.  Returns (buffer, metas, pack_w) where
    metas[i] = (row_offset, rows, cols) of the i-th leaf.
    """
    flat_consts = [jnp.asarray(c, jnp.float32) for c in flat_consts]
    pack_w = max(c.shape[1] for c in flat_consts)
    pack_w = -(-pack_w // 128) * 128
    pieces, metas, off = [], [], 0
    for c in flat_consts:
        r, w = c.shape
        r_pad = -(-r // SUBLANE) * SUBLANE
        buf = jnp.zeros((r_pad, pack_w), jnp.float32).at[:r, :w].set(c)
        pieces.append(buf)
        metas.append((off, r, w))
        off += r_pad
    return jnp.concatenate(pieces, axis=0), metas, pack_w


# ------------------------------- fused kernel ------------------------------ #
def build_fused_forward(params, seq_len=SEQ_LEN):
    plan = prepare_plan(params, seq_len)
    flat_consts, treedef = jax.tree_util.tree_flatten(plan)
    const_buf, metas, pack_w = _pack_constants(flat_consts)
    # Same structure as `plan`, but leaves are (row_offset, rows, cols) tuples.
    meta_tree = jax.tree_util.tree_unflatten(treedef, metas)
    n_const_rows = const_buf.shape[0]

    total_ds = math.prod(DOWNS)
    L0 = -(-seq_len // total_ds) * total_ds
    in_w = NUM_LEADS * L0

    def fused_kernel(x_ref, c_ref, o_ref):
        def get(meta):
            off, r, w = meta
            return c_ref[off:off + r, 0:w]          # static slice of packed consts

        def mm(v, meta):                            # one MXU matmul, f32 accumulation
            return jnp.dot(v.astype(MXU_DTYPE), get(meta).astype(MXU_DTYPE),
                           preferred_element_type=jnp.float32)

        cp = meta_tree

        # stem: conv1 (+ folded bn1) + relu
        h = jnp.maximum(mm(x_ref[...], cp["stem"]["M"]) + get(cp["stem"]["b"]), 0.0)

        for blk in cp["blocks"]:
            x_in = h
            # ---- skip path: max-pool phases (selection matmuls) + optional 1x1 conv
            skip = x_in
            if "pool" in blk:
                phases = [mm(x_in, s) + get(m)
                          for s, m in zip(blk["pool"]["S"], blk["pool"]["m"])]
                skip = functools.reduce(jnp.maximum, phases)
            if "skip_conv" in blk:
                skip = mm(skip, blk["skip_conv"]["M"]) + get(blk["skip_conv"]["b"])
            # ---- main path
            if "pre" in blk:  # bn1 + relu (+ dropout = id) of non-first blocks
                h = jnp.maximum(h * get(blk["pre"]["s"]) + get(blk["pre"]["b"]), 0.0)
            # conv1 (+ folded bn2) + relu (+ dropout = id)
            h = jnp.maximum(mm(h, blk["conv1"]["M"]) + get(blk["conv1"]["b"]), 0.0)
            # conv2 (strided, + bias)
            h = mm(h, blk["conv2"]["M"]) + get(blk["conv2"]["b"])
            # squeeze-excitation channel gates
            if "se" in blk:
                y = mm(h, blk["se"]["avg"])                      # (B, C) mean over length
                g = jnp.maximum(mm(y, blk["se"]["w1"]), 0.0)
                g = mm(g, blk["se"]["w2"])
                gate = pl.reciprocal(1.0 + jnp.exp(-g), approx=True)   # sigmoid on EUP
                h = h * mm(gate, blk["se"]["rep"])               # broadcast gates to (B, L*C)
            h = h + skip                                         # residual add
        # final bn2 + relu (+ dropout = id) and the (lane-padded) linear classifier
        h = jnp.maximum(h * get(cp["head"]["s"]) + get(cp["head"]["b"]), 0.0)
        o_ref[...] = mm(h, cp["head"]["W"]) + get(cp["head"]["bias"])

    def forward(traces):
        # PyTorch glue: optional trailing-singleton squeeze + pad to a multiple
        # of the total downsampling factor (matches ECGModel.forward).
        if traces.ndim == 4 and traces.shape[-1] == 1:
            traces = traces[..., 0]
        B, C_in, L = traces.shape
        desired = -(-L // total_ds) * total_ds
        if desired > L:
            traces = jnp.pad(traces, ((0, 0), (0, 0), (0, desired - L)))
        assert desired == L0 and C_in == NUM_LEADS, "input differs from prepared plan"
        # channel-major flatten == torch's (B, C, L) memory order; free reshape.
        x_flat = traces.reshape(B, C_in * desired).astype(jnp.float32)

        # Pad batch so the matmul M-dimension is at least a full f32 sublane
        # tile; larger batches are tiled over a (parallel) grid axis.
        tile_b = min(MAX_TILE_B, -(-B // SUBLANE) * SUBLANE)
        b_pad = -(-B // tile_b) * tile_b
        if b_pad > B:
            x_flat = jnp.pad(x_flat, ((0, b_pad - B), (0, 0)))
        n_tiles = b_pad // tile_b

        out = pl.pallas_call(
            fused_kernel,
            out_shape=jax.ShapeDtypeStruct((b_pad, OUT_PAD), jnp.float32),
            grid=(n_tiles,),
            in_specs=[
                # default memory space for blocked specs is VMEM
                pl.BlockSpec((tile_b, in_w), lambda i: (i, 0)),          # batch tile
                pl.BlockSpec((n_const_rows, pack_w), lambda i: (0, 0)),  # packed consts (resident)
            ],
            out_specs=pl.BlockSpec((tile_b, OUT_PAD), lambda i: (i, 0)),
            compiler_params=pltpu.CompilerParams(
                dimension_semantics=("parallel",)),
        )(x_flat, const_buf)
        return out[:B, :NUM_OUTPUTS]

    return forward


# ------------------------------ parameter init ------------------------------ #
def _init_bn(key, c):
    k1, k2, k3, k4 = jax.random.split(key, 4)
    gamma = 1.0 + 0.1 * jax.random.normal(k1, (c,), jnp.float32)
    beta = 0.1 * jax.random.normal(k2, (c,), jnp.float32)
    mean = 0.1 * jax.random.normal(k3, (c,), jnp.float32)
    var = 0.9 + 0.2 * jax.random.uniform(k4, (c,), jnp.float32)
    return (gamma, beta, mean, var)


def init_params(key):
    keys = iter(jax.random.split(key, 64))
    p = {}
    p['conv1_w'] = 0.1 * jax.random.normal(next(keys), (FILTERS[0], NUM_LEADS, KS), jnp.float32)
    p['bn1'] = _init_bn(next(keys), FILTERS[0])
    blocks = []
    c_in = FILTERS[0]
    for i, (fs, ds) in enumerate(zip(FILTERS[1:], DOWNS[1:])):
        c_out = fs
        blk = {}
        if i != 0:
            blk['bn1'] = _init_bn(next(keys), c_in)
        blk['conv1_w'] = 0.1 * jax.random.normal(next(keys), (c_out, c_in, KS), jnp.float32)
        blk['bn2'] = _init_bn(next(keys), c_out)
        blk['conv2_w'] = 0.1 * jax.random.normal(next(keys), (c_out, c_out, KS), jnp.float32)
        blk['conv2_b'] = 0.1 * jax.random.normal(next(keys), (c_out,), jnp.float32)
        cr = c_out // SE_REDUCTION
        blk['se_w1_t'] = (0.1 * jax.random.normal(next(keys), (cr, c_out), jnp.float32)).T
        blk['se_w2_t'] = (0.1 * jax.random.normal(next(keys), (c_out, cr), jnp.float32)).T
        if c_in != c_out:
            blk['skip_w'] = 0.1 * jax.random.normal(next(keys), (c_out, c_in, 1), jnp.float32)
            blk['skip_b'] = 0.1 * jax.random.normal(next(keys), (c_out,), jnp.float32)
        blocks.append(blk)
        c_in = c_out
    p['blocks'] = blocks
    p['bn2'] = _init_bn(next(keys), c_in)
    total_ds = math.prod(DOWNS)
    final_len = (SEQ_LEN + total_ds - 1) // total_ds
    feat_dim = c_in * final_len
    p['fc_w'] = 0.1 * jax.random.normal(next(keys), (NUM_OUTPUTS, feat_dim), jnp.float32)
    p['fc_b'] = 0.1 * jax.random.normal(next(keys), (NUM_OUTPUTS,), jnp.float32)
    return p


# --------------------- pure-JAX reference (for checking) -------------------- #
def _ref_conv1d(x, w, b, stride, pad):
    out = jax.lax.conv_general_dilated(
        x, w.astype(jnp.float32), window_strides=(stride,), padding=[(pad, pad)],
        dimension_numbers=("NCH", "OIH", "NCH"), precision=jax.lax.Precision.HIGHEST)
    if b is not None:
        out = out + b[None, :, None]
    return out


def _ref_bn(x, bn):
    gamma, beta, mean, var = bn
    inv = gamma / jnp.sqrt(var + BN_EPS)
    return x * inv[None, :, None] + (beta - mean * inv)[None, :, None]


def _ref_maxpool_ceil(x, ds):
    B, C, L = x.shape
    L_out = -(-L // ds)
    pad = L_out * ds - L
    xp = jnp.pad(x, ((0, 0), (0, 0), (0, pad)), constant_values=-jnp.inf)
    return xp.reshape(B, C, L_out, ds).max(axis=-1)


def _ref_se(x, w1t, w2t):
    y = x.mean(axis=-1)
    h = jnp.maximum(jnp.dot(y, w1t, precision=jax.lax.Precision.HIGHEST), 0.0)
    z = jnp.dot(h, w2t, precision=jax.lax.Precision.HIGHEST)
    s = 1.0 / (1.0 + jnp.exp(-z))
    return x * s[:, :, None]


def ecg_forward_reference(traces, params):
    if traces.ndim == 4 and traces.shape[-1] == 1:
        traces = traces[..., 0]
    B, C, L = traces.shape
    total = math.prod(DOWNS)
    desired = -(-L // total) * total
    if desired > L:
        traces = jnp.pad(traces, ((0, 0), (0, 0), (0, desired - L)))
    x = traces.astype(jnp.float32)
    x = _ref_conv1d(x, params['conv1_w'], None, DOWNS[0], _padding(1, KS))
    x = jnp.maximum(_ref_bn(x, params['bn1']), 0.0)
    c_in = FILTERS[0]
    for i, (fs, ds) in enumerate(zip(FILTERS[1:], DOWNS[1:])):
        p = params['blocks'][i]
        xs = x
        if ds > 1:
            xs = _ref_maxpool_ceil(xs, ds)
        if c_in != fs:
            xs = _ref_conv1d(xs, p['skip_w'], p['skip_b'], 1, 0)
        h = x
        if i != 0:
            h = jnp.maximum(_ref_bn(h, p['bn1']), 0.0)
        h = _ref_conv1d(h, p['conv1_w'], None, 1, _padding(1, KS))
        h = jnp.maximum(_ref_bn(h, p['bn2']), 0.0)
        h = _ref_conv1d(h, p['conv2_w'], p['conv2_b'], ds, _padding(ds, KS))
        if not DONT_USE_SE:
            h = _ref_se(h, p['se_w1_t'], p['se_w2_t'])
        x = h + xs
        c_in = fs
    x = jnp.maximum(_ref_bn(x, params['bn2']), 0.0)
    feat = x.reshape(x.shape[0], -1)
    return jnp.dot(feat, params['fc_w'].T, precision=jax.lax.Precision.HIGHEST) + params['fc_b'][None, :]


# ----------------------------------- main ----------------------------------- #
if __name__ == "__main__":
    key = jax.random.PRNGKey(0)
    k_in, k_par = jax.random.split(key)
    traces = jax.random.normal(k_in, (BATCH, NUM_LEADS, SEQ_LEN), jnp.float32)
    params = init_params(k_par)

    forward = jax.jit(build_fused_forward(params, SEQ_LEN))
    logits = forward(traces)
    jax.block_until_ready(logits)

    assert logits.shape == (BATCH, NUM_OUTPUTS)
    assert bool(jnp.all(jnp.isfinite(logits)))

    # correctness check against a pure-JAX/XLA reference of the same network
    ref = ecg_forward_reference(traces, params)
    err = float(jnp.max(jnp.abs(logits - ref)))
    assert err < 1e-2, f"kernel vs reference mismatch: max abs err = {err}"

    print("KERNEL_OK")
</pallas_src>

<mosaic_0001>
module attributes {stable_mosaic.version = 11 : i64} {
  func.func @fused_kernel(%arg0: i32, %arg1: memref<8x64xf32, #tpu.memory_space<vmem>>, %arg2: memref<1736x256xf32, #tpu.memory_space<vmem>>, %arg3: memref<8x128xf32, #tpu.memory_space<vmem>>) attributes {dimension_semantics = [#tpu.dimension_semantics<parallel>], iteration_bounds = array<i64: 1>, scalar_prefetch = 0 : i64, scratch_operands = 0 : i64, tpu.core_type = #tpu.core_type<tc>, window_params = [{transform_indices = @transform_0, window_bounds = array<i64: 8, 64>}, {pipeline_mode = #tpu.pipeline_mode<synchronous>, transform_indices = @transform_1, window_bounds = array<i64: 1736, 256>}, {transform_indices = @transform_2, window_bounds = array<i64: 8, 128>}]} {
    %c0 = arith.constant 0 : index
    %c0_0 = arith.constant 0 : index
    %0 = vector.load %arg1[%c0, %c0_0] : memref<8x64xf32, #tpu.memory_space<vmem>>, vector<8x64xf32>
    %c1664 = arith.constant 1664 : index
    %c0_1 = arith.constant 0 : index
    %1 = vector.load %arg2[%c1664, %c0_1] : memref<1736x256xf32, #tpu.memory_space<vmem>>, vector<64x128xf32>
    %cst = arith.constant dense<0.000000e+00> : vector<8x128xf32>
    %2 = tpu.matmul %0, %1, %cst {dimension_numbers = #tpu.dot_dimension_numbers<[1], [0], [0], [1], [0, 0, 1, 1], [], []>} : vector<8x64xf32>, vector<64x128xf32>, vector<8x128xf32> -> vector<8x128xf32>
    %c1728 = arith.constant 1728 : index
    %c0_2 = arith.constant 0 : index
    %3 = vector.load %arg2[%c1728, %c0_2] : memref<1736x256xf32, #tpu.memory_space<vmem>>, vector<1x128xf32>
    %4 = vector.broadcast %3 : vector<1x128xf32> to vector<8x128xf32>
    %5 = arith.addf %2, %4 : vector<8x128xf32>
    %cst_3 = arith.constant 0.000000e+00 : f32
    %6 = vector.broadcast %cst_3 : f32 to vector<8x128xf32>
    %7 = arith.maximumf %5, %6 : vector<8x128xf32>
    %c400 = arith.constant 400 : index
    %c0_4 = arith.constant 0 : index
    %8 = vector.load %arg2[%c400, %c0_4] : memref<1736x256xf32, #tpu.memory_space<vmem>>, vector<128x64xf32>
    %cst_5 = arith.constant dense<0.000000e+00> : vector<8x64xf32>
    %9 = tpu.matmul %7, %8, %cst_5 {dimension_numbers = #tpu.dot_dimension_numbers<[1], [0], [0], [1], [0, 0, 1, 1], [], []>} : vector<8x128xf32>, vector<128x64xf32>, vector<8x64xf32> -> vector<8x64xf32>
    %c656 = arith.constant 656 : index
    %c0_6 = arith.constant 0 : index
    %10 = vector.load %arg2[%c656, %c0_6] : memref<1736x256xf32, #tpu.memory_space<vmem>>, vector<1x64xf32>
    %11 = vector.broadcast %10 : vector<1x64xf32> to vector<8x64xf32>
    %12 = arith.addf %9, %11 : vector<8x64xf32>
    %c528 = arith.constant 528 : index
    %c0_7 = arith.constant 0 : index
    %13 = vector.load %arg2[%c528, %c0_7] : memref<1736x256xf32, #tpu.memory_space<vmem>>, vector<128x64xf32>
    %cst_8 = arith.constant dense<0.000000e+00> : vector<8x64xf32>
    %14 = tpu.matmul %7, %13, %cst_8 {dimension_numbers = #tpu.dot_dimension_numbers<[1], [0], [0], [1], [0, 0, 1, 1], [], []>} : vector<8x128xf32>, vector<128x64xf32>, vector<8x64xf32> -> vector<8x64xf32>
    %c664 = arith.constant 664 : index
    %c0_9 = arith.constant 0 : index
    %15 = vector.load %arg2[%c664, %c0_9] : memref<1736x256xf32, #tpu.memory_space<vmem>>, vector<1x64xf32>
    %16 = vector.broadcast %15 : vector<1x64xf32> to vector<8x64xf32>
    %17 = arith.addf %14, %16 : vector<8x64xf32>
    %18 = arith.maximumf %12, %17 : vector<8x64xf32>
    %c840 = arith.constant 840 : index
    %c0_10 = arith.constant 0 : index
    %19 = vector.load %arg2[%c840, %c0_10] : memref<1736x256xf32, #tpu.memory_space<vmem>>, vector<64x128xf32>
    %cst_11 = arith.constant dense<0.000000e+00> : vector<8x128xf32>
    %20 = tpu.matmul %18, %19, %cst_11 {dimension_numbers = #tpu.dot_dimension_numbers<[1], [0], [0], [1], [0, 0, 1, 1], [], []>} : vector<8x64xf32>, vector<64x128xf32>, vector<8x128xf32> -> vector<8x128xf32>
    %c904 = arith.constant 904 : index
    %c0_12 = arith.constant 0 : index
    %21 = vector.load %arg2[%c904, %c0_12] : memref<1736x256xf32, #tpu.memory_space<vmem>>, vector<1x128xf32>
    %22 = vector.broadcast %21 : vector<1x128xf32> to vector<8x128xf32>
    %23 = arith.addf %20, %22 : vector<8x128xf32>
    %c0_13 = arith.constant 0 : index
    %c0_14 = arith.constant 0 : index
    %24 = vector.load %arg2[%c0_13, %c0_14] : memref<1736x256xf32, #tpu.memory_space<vmem>>, vector<128x256xf32>
    %cst_15 = arith.constant dense<0.000000e+00> : vector<8x256xf32>
    %25 = tpu.matmul %7, %24, %cst_15 {dimension_numbers = #tpu.dot_dimension_numbers<[1], [0], [0], [1], [0, 0, 1, 1], [], []>} : vector<8x128xf32>, vector<128x256xf32>, vector<8x256xf32> -> vector<8x256xf32>
    %c128 = arith.constant 128 : index
    %c0_16 = arith.constant 0 : index
    %26 = vector.load %arg2[%c128, %c0_16] : memref<1736x256xf32, #tpu.memory_space<vmem>>, vector<1x256xf32>
    %27 = vector.broadcast %26 : vector<1x256xf32> to vector<8x256xf32>
    %28 = arith.addf %25, %27 : vector<8x256xf32>
    %cst_17 = arith.constant 0.000000e+00 : f32
    %29 = vector.broadcast %cst_17 : f32 to vector<8x256xf32>
    %30 = arith.maximumf %28, %29 : vector<8x256xf32>
    %c136 = arith.constant 136 : index
    %c0_18 = arith.constant 0 : index
    %31 = vector.load %arg2[%c136, %c0_18] : memref<1736x256xf32, #tpu.memory_space<vmem>>, vector<256x128xf32>
    %cst_19 = arith.constant dense<0.000000e+00> : vector<8x128xf32>
    %32 = tpu.matmul %30, %31, %cst_19 {dimension_numbers = #tpu.dot_dimension_numbers<[1], [0], [0], [1], [0, 0, 1, 1], [], []>} : vector<8x256xf32>, vector<256x128xf32>, vector<8x128xf32> -> vector<8x128xf32>
    %c392 = arith.constant 392 : index
    %c0_20 = arith.constant 0 : index
    %33 = vector.load %arg2[%c392, %c0_20] : memref<1736x256xf32, #tpu.memory_space<vmem>>, vector<1x128xf32>
    %34 = vector.broadcast %33 : vector<1x128xf32> to vector<8x128xf32>
    %35 = arith.addf %32, %34 : vector<8x128xf32>
    %c672 = arith.constant 672 : index
    %c0_21 = arith.constant 0 : index
    %36 = vector.load %arg2[%c672, %c0_21] : memref<1736x256xf32, #tpu.memory_space<vmem>>, vector<128x16xf32>
    %cst_22 = arith.constant dense<0.000000e+00> : vector<8x16xf32>
    %37 = tpu.matmul %35, %36, %cst_22 {dimension_numbers = #tpu.dot_dimension_numbers<[1], [0], [0], [1], [0, 0, 1, 1], [], []>} : vector<8x128xf32>, vector<128x16xf32>, vector<8x16xf32> -> vector<8x16xf32>
    %c816 = arith.constant 816 : index
    %c0_23 = arith.constant 0 : index
    %38 = vector.load %arg2[%c816, %c0_23] : memref<1736x256xf32, #tpu.memory_space<vmem>>, vector<16x4xf32>
    %cst_24 = arith.constant dense<0.000000e+00> : vector<8x4xf32>
    %39 = tpu.matmul %37, %38, %cst_24 {dimension_numbers = #tpu.dot_dimension_numbers<[1], [0], [0], [1], [0, 0, 1, 1], [], []>} : vector<8x16xf32>, vector<16x4xf32>, vector<8x4xf32> -> vector<8x4xf32>
    %cst_25 = arith.constant 0.000000e+00 : f32
    %40 = vector.broadcast %cst_25 : f32 to vector<8x4xf32>
    %41 = arith.maximumf %39, %40 : vector<8x4xf32>
    %c832 = arith.constant 832 : index
    %c0_26 = arith.constant 0 : index
    %42 = vector.load %arg2[%c832, %c0_26] : memref<1736x256xf32, #tpu.memory_space<vmem>>, vector<4x16xf32>
    %cst_27 = arith.constant dense<0.000000e+00> : vector<8x16xf32>
    %43 = tpu.matmul %41, %42, %cst_27 {dimension_numbers = #tpu.dot_dimension_numbers<[1], [0], [0], [1], [0, 0, 1, 1], [], []>} : vector<8x4xf32>, vector<4x16xf32>, vector<8x16xf32> -> vector<8x16xf32>
    %cst_28 = arith.constant 0.000000e+00 : f32
    %44 = vector.broadcast %cst_28 : f32 to vector<8x16xf32>
    %45 = arith.subf %44, %43 : vector<8x16xf32>
    %46 = math.exp %45 : vector<8x16xf32>
    %cst_29 = arith.constant 1.000000e+00 : f32
    %47 = vector.broadcast %cst_29 : f32 to vector<8x16xf32>
    %48 = arith.addf %47, %46 : vector<8x16xf32>
    %49 = tpu.reciprocal %48 {approx = true} : vector<8x16xf32> -> vector<8x16xf32>
    %c800 = arith.constant 800 : index
    %c0_30 = arith.constant 0 : index
    %50 = vector.load %arg2[%c800, %c0_30] : memref<1736x256xf32, #tpu.memory_space<vmem>>, vector<16x128xf32>
    %cst_31 = arith.constant dense<0.000000e+00> : vector<8x128xf32>
    %51 = tpu.matmul %49, %50, %cst_31 {dimension_numbers = #tpu.dot_dimension_numbers<[1], [0], [0], [1], [0, 0, 1, 1], [], []>} : vector<8x16xf32>, vector<16x128xf32>, vector<8x128xf32> -> vector<8x128xf32>
    %52 = arith.mulf %35, %51 : vector<8x128xf32>
    %53 = arith.addf %52, %23 : vector<8x128xf32>
    %c1184 = arith.constant 1184 : index
    %c0_32 = arith.constant 0 : index
    %54 = vector.load %arg2[%c1184, %c0_32] : memref<1736x256xf32, #tpu.memory_space<vmem>>, vector<128x64xf32>
    %cst_33 = arith.constant dense<0.000000e+00> : vector<8x64xf32>
    %55 = tpu.matmul %53, %54, %cst_33 {dimension_numbers = #tpu.dot_dimension_numbers<[1], [0], [0], [1], [0, 0, 1, 1], [], []>} : vector<8x128xf32>, vector<128x64xf32>, vector<8x64xf32> -> vector<8x64xf32>
    %c1440 = arith.constant 1440 : index
    %c0_34 = arith.constant 0 : index
    %56 = vector.load %arg2[%c1440, %c0_34] : memref<1736x256xf32, #tpu.memory_space<vmem>>, vector<1x64xf32>
    %57 = vector.broadcast %56 : vector<1x64xf32> to vector<8x64xf32>
    %58 = arith.addf %55, %57 : vector<8x64xf32>
    %c1312 = arith.constant 1312 : index
    %c0_35 = arith.constant 0 : index
    %59 = vector.load %arg2[%c1312, %c0_35] : memref<1736x256xf32, #tpu.memory_space<vmem>>, vector<128x64xf32>
    %cst_36 = arith.constant dense<0.000000e+00> : vector<8x64xf32>
    %60 = tpu.matmul %53, %59, %cst_36 {dimension_numbers = #tpu.dot_dimension_numbers<[1], [0], [0], [1], [0, 0, 1, 1], [], []>} : vector<8x128xf32>, vector<128x64xf32>, vector<8x64xf32> -> vector<8x64xf32>
    %c1448 = arith.constant 1448 : index
    %c0_37 = arith.constant 0 : index
    %61 = vector.load %arg2[%c1448, %c0_37] : memref<1736x256xf32, #tpu.memory_space<vmem>>, vector<1x64xf32>
    %62 = vector.broadcast %61 : vector<1x64xf32> to vector<8x64xf32>
    %63 = arith.addf %60, %62 : vector<8x64xf32>
    %64 = arith.maximumf %58, %63 : vector<8x64xf32>
    %c1464 = arith.constant 1464 : index
    %c0_38 = arith.constant 0 : index
    %65 = vector.load %arg2[%c1464, %c0_38] : memref<1736x256xf32, #tpu.memory_space<vmem>>, vector<1x128xf32>
    %66 = vector.broadcast %65 : vector<1x128xf32> to vector<8x128xf32>
    %67 = arith.mulf %53, %66 : vector<8x128xf32>
    %c1456 = arith.constant 1456 : index
    %c0_39 = arith.constant 0 : index
    %68 = vector.load %arg2[%c1456, %c0_39] : memref<1736x256xf32, #tpu.memory_space<vmem>>, vector<1x128xf32>
    %69 = vector.broadcast %68 : vector<1x128xf32> to vector<8x128xf32>
    %70 = arith.addf %67, %69 : vector<8x128xf32>
    %cst_40 = arith.constant 0.000000e+00 : f32
    %71 = vector.broadcast %cst_40 : f32 to vector<8x128xf32>
    %72 = arith.maximumf %70, %71 : vector<8x128xf32>
    %c912 = arith.constant 912 : index
    %c0_41 = arith.constant 0 : index
    %73 = vector.load %arg2[%c912, %c0_41] : memref<1736x256xf32, #tpu.memory_space<vmem>>, vector<128x128xf32>
    %cst_42 = arith.constant dense<0.000000e+00> : vector<8x128xf32>
    %74 = tpu.matmul %72, %73, %cst_42 {dimension_numbers = #tpu.dot_dimension_numbers<[1], [0], [0], [1], [0, 0, 1, 1], [], []>} : vector<8x128xf32>, vector<128x128xf32>, vector<8x128xf32> -> vector<8x128xf32>
    %c1040 = arith.constant 1040 : index
    %c0_43 = arith.constant 0 : index
    %75 = vector.load %arg2[%c1040, %c0_43] : memref<1736x256xf32, #tpu.memory_space<vmem>>, vector<1x128xf32>
    %76 = vector.broadcast %75 : vector<1x128xf32> to vector<8x128xf32>
    %77 = arith.addf %74, %76 : vector<8x128xf32>
    %cst_44 = arith.constant 0.000000e+00 : f32
    %78 = vector.broadcast %cst_44 : f32 to vector<8x128xf32>
    %79 = arith.maximumf %77, %78 : vector<8x128xf32>
    %c1048 = arith.constant 1048 : index
    %c0_45 = arith.constant 0 : index
    %80 = vector.load %arg2[%c1048, %c0_45] : memref<1736x256xf32, #tpu.memory_space<vmem>>, vector<128x64xf32>
    %cst_46 = arith.constant dense<0.000000e+00> : vector<8x64xf32>
    %81 = tpu.matmul %79, %80, %cst_46 {dimension_numbers = #tpu.dot_dimension_numbers<[1], [0], [0], [1], [0, 0, 1, 1], [], []>} : vector<8x128xf32>, vector<128x64xf32>, vector<8x64xf32> -> vector<8x64xf32>
    %c1176 = arith.constant 1176 : index
    %c0_47 = arith.constant 0 : index
    %82 = vector.load %arg2[%c1176, %c0_47] : memref<1736x256xf32, #tpu.memory_space<vmem>>, vector<1x64xf32>
    %83 = vector.broadcast %82 : vector<1x64xf32> to vector<8x64xf32>
    %84 = arith.addf %81, %83 : vector<8x64xf32>
    %c1472 = arith.constant 1472 : index
    %c0_48 = arith.constant 0 : index
    %85 = vector.load %arg2[%c1472, %c0_48] : memref<1736x256xf32, #tpu.memory_space<vmem>>, vector<64x16xf32>
    %cst_49 = arith.constant dense<0.000000e+00> : vector<8x16xf32>
    %86 = tpu.matmul %84, %85, %cst_49 {dimension_numbers = #tpu.dot_dimension_numbers<[1], [0], [0], [1], [0, 0, 1, 1], [], []>} : vector<8x64xf32>, vector<64x16xf32>, vector<8x16xf32> -> vector<8x16xf32>
    %c1552 = arith.constant 1552 : index
    %c0_50 = arith.constant 0 : index
    %87 = vector.load %arg2[%c1552, %c0_50] : memref<1736x256xf32, #tpu.memory_space<vmem>>, vector<16x4xf32>
    %cst_51 = arith.constant dense<0.000000e+00> : vector<8x4xf32>
    %88 = tpu.matmul %86, %87, %cst_51 {dimension_numbers = #tpu.dot_dimension_numbers<[1], [0], [0], [1], [0, 0, 1, 1], [], []>} : vector<8x16xf32>, vector<16x4xf32>, vector<8x4xf32> -> vector<8x4xf32>
    %cst_52 = arith.constant 0.000000e+00 : f32
    %89 = vector.broadcast %cst_52 : f32 to vector<8x4xf32>
    %90 = arith.maximumf %88, %89 : vector<8x4xf32>
    %c1568 = arith.constant 1568 : index
    %c0_53 = arith.constant 0 : index
    %91 = vector.load %arg2[%c1568, %c0_53] : memref<1736x256xf32, #tpu.memory_space<vmem>>, vector<4x16xf32>
    %cst_54 = arith.constant dense<0.000000e+00> : vector<8x16xf32>
    %92 = tpu.matmul %90, %91, %cst_54 {dimension_numbers = #tpu.dot_dimension_numbers<[1], [0], [0], [1], [0, 0, 1, 1], [], []>} : vector<8x4xf32>, vector<4x16xf32>, vector<8x16xf32> -> vector<8x16xf32>
    %cst_55 = arith.constant 0.000000e+00 : f32
    %93 = vector.broadcast %cst_55 : f32 to vector<8x16xf32>
    %94 = arith.subf %93, %92 : vector<8x16xf32>
    %95 = math.exp %94 : vector<8x16xf32>
    %cst_56 = arith.constant 1.000000e+00 : f32
    %96 = vector.broadcast %cst_56 : f32 to vector<8x16xf32>
    %97 = arith.addf %96, %95 : vector<8x16xf32>
    %98 = tpu.reciprocal %97 {approx = true} : vector<8x16xf32> -> vector<8x16xf32>
    %c1536 = arith.constant 1536 : index
    %c0_57 = arith.constant 0 : index
    %99 = vector.load %arg2[%c1536, %c0_57] : memref<1736x256xf32, #tpu.memory_space<vmem>>, vector<16x64xf32>
    %cst_58 = arith.constant dense<0.000000e+00> : vector<8x64xf32>
    %100 = tpu.matmul %98, %99, %cst_58 {dimension_numbers = #tpu.dot_dimension_numbers<[1], [0], [0], [1], [0, 0, 1, 1], [], []>} : vector<8x16xf32>, vector<16x64xf32>, vector<8x64xf32> -> vector<8x64xf32>
    %101 = arith.mulf %84, %100 : vector<8x64xf32>
    %102 = arith.addf %101, %64 : vector<8x64xf32>
    %c1656 = arith.constant 1656 : index
    %c0_59 = arith.constant 0 : index
    %103 = vector.load %arg2[%c1656, %c0_59] : memref<1736x256xf32, #tpu.memory_space<vmem>>, vector<1x64xf32>
    %104 = vector.broadcast %103 : vector<1x64xf32> to vector<8x64xf32>
    %105 = arith.mulf %102, %104 : vector<8x64xf32>
    %c1640 = arith.constant 1640 : index
    %c0_60 = arith.constant 0 : index
    %106 = vector.load %arg2[%c1640, %c0_60] : memref<1736x256xf32, #tpu.memory_space<vmem>>, vector<1x64xf32>
    %107 = vector.broadcast %106 : vector<1x64xf32> to vector<8x64xf32>
    %108 = arith.addf %105, %107 : vector<8x64xf32>
    %cst_61 = arith.constant 0.000000e+00 : f32
    %109 = vector.broadcast %cst_61 : f32 to vector<8x64xf32>
    %110 = arith.maximumf %108, %109 : vector<8x64xf32>
    %c1576 = arith.constant 1576 : index
    %c0_62 = arith.constant 0 : index
    %111 = vector.load %arg2[%c1576, %c0_62] : memref<1736x256xf32, #tpu.memory_space<vmem>>, vector<64x128xf32>
    %cst_63 = arith.constant dense<0.000000e+00> : vector<8x128xf32>
    %112 = tpu.matmul %110, %111, %cst_63 {dimension_numbers = #tpu.dot_dimension_numbers<[1], [0], [0], [1], [0, 0, 1, 1], [], []>} : vector<8x64xf32>, vector<64x128xf32>, vector<8x128xf32> -> vector<8x128xf32>
    %c1648 = arith.constant 1648 : index
    %c0_64 = arith.constant 0 : index
    %113 = vector.load %arg2[%c1648, %c0_64] : memref<1736x256xf32, #tpu.memory_space<vmem>>, vector<1x128xf32>
    %114 = vector.broadcast %113 : vector<1x128xf32> to vector<8x128xf32>
    %115 = arith.addf %112, %114 : vector<8x128xf32>
    %c0_65 = arith.constant 0 : index
    %c0_66 = arith.constant 0 : index
    %116 = vector.load %arg3[%c0_65, %c0_66] : memref<8x128xf32, #tpu.memory_space<vmem>>, vector<8x128xf32>
    tpu.vector_store %arg3[%c0_65, %c0_66], %115 {strides = array<i32>} : memref<8x128xf32, #tpu.memory_space<vmem>>, vector<8x128xf32>,
    return
  }
  func.func @transform_0(%arg0: i32) -> (i32, i32) {
    %c0_i32 = arith.constant 0 : i32
    %c0_i32_0 = arith.constant 0 : i32
    return %arg0, %c0_i32 : i32, i32
  }
  func.func @transform_1(%arg0: i32) -> (i32, i32) {
    %c0_i32 = arith.constant 0 : i32
    %c0_i32_0 = arith.constant 0 : i32
    %c0_i32_1 = arith.constant 0 : i32
    return %c0_i32, %c0_i32_0 : i32, i32
  }
  func.func @transform_2(%arg0: i32) -> (i32, i32) {
    %c0_i32 = arith.constant 0 : i32
    %c0_i32_0 = arith.constant 0 : i32
    return %arg0, %c0_i32 : i32, i32
  }
}

</mosaic_0001>

<llo_original>
// kernel: forward.1
$region0: #{forward.1}
  #allocation0 [shape = 'u32[]', space=smem, size = 0x4, offset = 0x4, fixed_abs, tag = 'smem constant byte address 0x4 - core index']
  #allocation1 [shape = 'u32[144,128]{1,0:T(1,128)}', space=vmem, size = 0x12000, scoped, tag = 'internal scratch']
  %s0 = inlined_call_operand.vmem [shape: f32[8,64], index: 0, kind: input, shape index: {}]
  %s1 = inlined_call_operand.hbm [shape: f32[1736,256], index: 1, kind: input, shape index: {}]
  %s2 = inlined_call_operand.vmem [shape: f32[8,128], index: 2, kind: output, shape index: {}]
  %s3 = sld [smem:[#allocation0]]
  $region22: #{forward.1} parent=0
    _
  %s5 = ssub.s32 1, %s3
  %s6 = scalar_select 0, %s5, %s3
  $region1: #{forward.1} parent=0
    #allocation2 [shape = 'u8[1777664]{0}', space=vmem, size = 0x1b2000, scoped, tag = 'input window, operand 1, single buffered']
    #allocation3 [shape = 's32[1]{0}', space=sflag, size = 0x4, scoped, tag = 'scoped memory for forward.1']
    %7 = vsyncpa [#allocation3], 0
    // Predicated region
    $region2: #{forward.1} parent=1 // pred_check
      _
    $region3: #{forward.1} parent=1 // pred_check_branch
      %9 = sbr.rel (0) target = $region5
    $region4: #{forward.1} parent=1 // pred_region
      _
    $region5: #{forward.1} parent=1 // pred_fallthru
      _
    // Predicated region
    $region6: #{forward.1} parent=1 // pred_check
      _
    $region7: #{forward.1} parent=1 // pred_check_branch
      %11 = sbr.rel (0) target = $region9
    $region8: #{forward.1} parent=1 // pred_region
      %s13 = ssub.s32 55552, 55552
      %14 = vsyncadd [#allocation3], %s13
      %s15 = sshll.u32 [#allocation2], 4
      %s16 = int_to_ptr.vmem [resolvable:$true] %s15
      %21 = dma.hbm_to_vmem [thread:$0]  %s1, 55552, %s16, [#allocation3], 256, 256, 16
    $region9: #{forward.1} parent=1 // pred_fallthru
      _
    // Predicated region
    $region10: #{forward.1} parent=1 // pred_check
      _
    $region11: #{forward.1} parent=1 // pred_check_branch
      %23 = sbr.rel (0) target = $region13
    $region12: #{forward.1} parent=1 // pred_region
      %24 = dma.done [#allocation3], 55552
    $region13: #{forward.1} parent=1 // pred_fallthru
      _
    %v25 = vld [vmem:[%s0] sm:$0xff]
    %v26 = vld [vmem:[#allocation2 + $0xd00] sm:$0xff]
    %v27 = vld [vmem:[#allocation2 + $0xd10] sm:$0xff]
    %v28 = vld [vmem:[#allocation2 + $0xd20] sm:$0xff]
    %v29 = vld [vmem:[#allocation2 + $0xd30] sm:$0xff]
    %v30 = vld [vmem:[#allocation2 + $0xd40] sm:$0xff]
    %v31 = vld [vmem:[#allocation2 + $0xd50] sm:$0xff]
    %v32 = vld [vmem:[#allocation2 + $0xd60] sm:$0xff]
    %v33 = vld [vmem:[#allocation2 + $0xd70] sm:$0xff]
    %v34 = vld [vmem:[#allocation2 + $0xd80] ss:$0 sm:$0xff]
    %vm35 = vcmask 523264
    %v37 = vsel %vm35, %v25, 0
    %39 = vmatprep.subr.mxu0 0.0
    %40 = vmatpush1.msra.mxu0 %v26
    %41 = vmatprep.subr.mxu0 0.0
    %42 = vmatpush1.msra.mxu0 %v27
    %43 = vmatprep.subr.mxu0 0.0
    %44 = vmatpush1.msra.mxu0 %v28
    %45 = vmatprep.subr.mxu0 0.0
    %46 = vmatpush1.msra.mxu0 %v29
    %47 = vmatprep.subr.mxu0 0.0
    %48 = vmatpush1.msra.mxu0 %v30
    %49 = vmatprep.subr.mxu0 0.0
    %50 = vmatpush1.msra.mxu0 %v31
    %51 = vmatprep.subr.mxu0 0.0
    %52 = vmatpush1.msra.mxu0 %v32
    %53 = vmatprep.subr.mxu0 0.0
    %54 = vmatpush1.msra.mxu0 %v33
    %55 = vmatprep.subr.mxu0 0.0
    %56 = vmatpush1.msra.mxu0 0.0
    %57 = vmatprep.subr.mxu0 0.0
    %58 = vmatpush1.msra.mxu0 0.0
    %59 = vmatprep.subr.mxu0 0.0
    %60 = vmatpush1.msra.mxu0 0.0
    %61 = vmatprep.subr.mxu0 0.0
    %62 = vmatpush1.msra.mxu0 0.0
    %63 = vmatprep.subr.mxu0 0.0
    %64 = vmatpush1.msra.mxu0 0.0
    %65 = vmatprep.subr.mxu0 0.0
    %66 = vmatpush1.msra.mxu0 0.0
    %67 = vmatprep.subr.mxu0 0.0
    %68 = vmatpush1.msra.mxu0 0.0
    %69 = vmatprep.subr.mxu0 0.0
    %70 = vmatpush1.msra.mxu0 0.0
    %71 = vmatprep.subr.mxu0 0.0
    %72 = vmatpush1.msra.mxu0 0.0
    %73 = vmatprep.subr.mxu0 0.0
    %74 = vmatpush1.msra.mxu0 0.0
    %75 = vmatprep.subr.mxu0 0.0
    %76 = vmatpush1.msra.mxu0 0.0
    %77 = vmatprep.subr.mxu0 0.0
    %78 = vmatpush1.msra.mxu0 0.0
    %79 = vmatprep.subr.mxu0 0.0
    %80 = vmatpush1.msra.mxu0 0.0
    %81 = vmatprep.subr.mxu0 0.0
    %82 = vmatpush1.msra.mxu0 0.0
    %83 = vmatprep.subr.mxu0 0.0
    %84 = vmatpush1.msra.mxu0 0.0
    %85 = vmatprep.subr.mxu0 0.0
    %86 = vmatpush1.msra.mxu0 0.0
    %87 = vmatprep.subr.mxu0 0.0
    %88 = vmatpush1.msra.mxu0 0.0
    %89 = vmatprep.subr.mxu0 0.0
    %90 = vmatpush1.msra.mxu0 0.0
    %91 = vmatprep.subr.mxu0 0.0
    %92 = vmatpush1.msra.mxu0 0.0
    %93 = vmatprep.subr.mxu0 0.0
    %94 = vmatpush1.msra.mxu0 0.0
    %95 = vmatprep.subr.mxu0 0.0
    %96 = vmatpush1.msra.mxu0 0.0
    %97 = vmatprep.subr.mxu0 0.0
    %98 = vmatpush1.msra.mxu0 0.0
    %99 = vmatprep.subr.mxu0 0.0
    %100 = vmatpush1.msra.mxu0 0.0
    %101 = vmatprep.subr.mxu0 0.0
    %102 = vmatpush1.msra.mxu0 0.0
    %103 = vmatprep.mubr.f32.mxu0 0.0
    %104 = vmatmul.mubr.f32.gmra.mrb[0].mxu0 %v37
    %v105 = vpop.f32.mrb[0].mxu0
    %v106 = vadd.f32 %v34, %v105
    %v107 = vpop.f32.mrb[0].mxu0
    %108 = vdwg.mxu0
    %v109 = vmax.f32 %v106, 0.0
    %v110 = vld [vmem:[#allocation2 + $0x320] sm:$0xff]
    %v111 = vld [vmem:[#allocation2 + $0x330] sm:$0xff]
    %v112 = vld [vmem:[#allocation2 + $0x340] sm:$0xff]
    %v113 = vld [vmem:[#allocation2 + $0x350] sm:$0xff]
    %v114 = vld [vmem:[#allocation2 + $0x360] sm:$0xff]
    %v115 = vld [vmem:[#allocation2 + $0x370] sm:$0xff]
    %v116 = vld [vmem:[#allocation2 + $0x380] sm:$0xff]
    %v117 = vld [vmem:[#allocation2 + $0x390] sm:$0xff]
    %v118 = vld [vmem:[#allocation2 + $0x3a0] sm:$0xff]
    %v119 = vld [vmem:[#allocation2 + $0x3b0] sm:$0xff]
    %v120 = vld [vmem:[#allocation2 + $0x3c0] sm:$0xff]
    %v121 = vld [vmem:[#allocation2 + $0x3d0] sm:$0xff]
    %v122 = vld [vmem:[#allocation2 + $0x3e0] sm:$0xff]
    %v123 = vld [vmem:[#allocation2 + $0x3f0] sm:$0xff]
    %v124 = vld [vmem:[#allocation2 + $0x400] sm:$0xff]
    %v125 = vld [vmem:[#allocation2 + $0x410] sm:$0xff]
    %v126 = vld [vmem:[#allocation2 + $0x520] ss:$0 sm:$0xff]
    %127 = vmatprep.subr.mxu0 0.0
    %128 = vmatpush1.msra.mxu0 %v110
    %129 = vmatprep.subr.mxu0 0.0
    %130 = vmatpush1.msra.mxu0 %v111
    %131 = vmatprep.subr.mxu0 0.0
    %132 = vmatpush1.msra.mxu0 %v112
    %133 = vmatprep.subr.mxu0 0.0
    %134 = vmatpush1.msra.mxu0 %v113
    %135 = vmatprep.subr.mxu0 0.0
    %136 = vmatpush1.msra.mxu0 %v114
    %137 = vmatprep.subr.mxu0 0.0
    %138 = vmatpush1.msra.mxu0 %v115
    %139 = vmatprep.subr.mxu0 0.0
    %140 = vmatpush1.msra.mxu0 %v116
    %141 = vmatprep.subr.mxu0 0.0
    %142 = vmatpush1.msra.mxu0 %v117
    %143 = vmatprep.subr.mxu0 0.0
    %144 = vmatpush1.msra.mxu0 %v118
    %145 = vmatprep.subr.mxu0 0.0
    %146 = vmatpush1.msra.mxu0 %v119
    %147 = vmatprep.subr.mxu0 0.0
    %148 = vmatpush1.msra.mxu0 %v120
    %149 = vmatprep.subr.mxu0 0.0
    %150 = vmatpush1.msra.mxu0 %v121
    %151 = vmatprep.subr.mxu0 0.0
    %152 = vmatpush1.msra.mxu0 %v122
    %153 = vmatprep.subr.mxu0 0.0
    %154 = vmatpush1.msra.mxu0 %v123
    %155 = vmatprep.subr.mxu0 0.0
    %156 = vmatpush1.msra.mxu0 %v124
    %157 = vmatprep.subr.mxu0 0.0
    %158 = vmatpush1.msra.mxu0 %v125
    %159 = vmatprep.subr.mxu0 0.0
    %160 = vmatpush1.msra.mxu0 0.0
    %161 = vmatprep.subr.mxu0 0.0
    %162 = vmatpush1.msra.mxu0 0.0
    %163 = vmatprep.subr.mxu0 0.0
    %164 = vmatpush1.msra.mxu0 0.0
    %165 = vmatprep.subr.mxu0 0.0
    %166 = vmatpush1.msra.mxu0 0.0
    %167 = vmatprep.subr.mxu0 0.0
    %168 = vmatpush1.msra.mxu0 0.0
    %169 = vmatprep.subr.mxu0 0.0
    %170 = vmatpush1.msra.mxu0 0.0
    %171 = vmatprep.subr.mxu0 0.0
    %172 = vmatpush1.msra.mxu0 0.0
    %173 = vmatprep.subr.mxu0 0.0
    %174 = vmatpush1.msra.mxu0 0.0
    %175 = vmatprep.subr.mxu0 0.0
    %176 = vmatpush1.msra.mxu0 0.0
    %177 = vmatprep.subr.mxu0 0.0
    %178 = vmatpush1.msra.mxu0 0.0
    %179 = vmatprep.subr.mxu0 0.0
    %180 = vmatpush1.msra.mxu0 0.0
    %181 = vmatprep.subr.mxu0 0.0
    %182 = vmatpush1.msra.mxu0 0.0
    %183 = vmatprep.subr.mxu0 0.0
    %184 = vmatpush1.msra.mxu0 0.0
    %185 = vmatprep.subr.mxu0 0.0
    %186 = vmatpush1.msra.mxu0 0.0
    %187 = vmatprep.subr.mxu0 0.0
    %188 = vmatpush1.msra.mxu0 0.0
    %189 = vmatprep.subr.mxu0 0.0
    %190 = vmatpush1.msra.mxu0 0.0
    %191 = vmatprep.mubr.f32.mxu0 0.0
    %192 = vmatmul.mubr.f32.gmra.mrb[0].mxu0 %v109
    %v193 = vpop.f32.mrb[0].mxu0
    %v194 = vadd.f32 %v126, %v193
    %v195 = vpop.f32.mrb[0].mxu0
    %196 = vdwg.mxu0
    %v197 = vld [vmem:[#allocation2 + $0x420] sm:$0xff]
    %v198 = vld [vmem:[#allocation2 + $0x430] sm:$0xff]
    %v199 = vld [vmem:[#allocation2 + $0x440] sm:$0xff]
    %v200 = vld [vmem:[#allocation2 + $0x450] sm:$0xff]
    %v201 = vld [vmem:[#allocation2 + $0x460] sm:$0xff]
    %v202 = vld [vmem:[#allocation2 + $0x470] sm:$0xff]
    %v203 = vld [vmem:[#allocation2 + $0x480] sm:$0xff]
    %v204 = vld [vmem:[#allocation2 + $0x490] sm:$0xff]
    %v205 = vld [vmem:[#allocation2 + $0x4a0] sm:$0xff]
    %v206 = vld [vmem:[#allocation2 + $0x4b0] sm:$0xff]
    %v207 = vld [vmem:[#allocation2 + $0x4c0] sm:$0xff]
    %v208 = vld [vmem:[#allocation2 + $0x4d0] sm:$0xff]
    %v209 = vld [vmem:[#allocation2 + $0x4e0] sm:$0xff]
    %v210 = vld [vmem:[#allocation2 + $0x4f0] sm:$0xff]
    %v211 = vld [vmem:[#allocation2 + $0x500] sm:$0xff]
    %v212 = vld [vmem:[#allocation2 + $0x510] sm:$0xff]
    %v213 = vld [vmem:[#allocation2 + $0x530] ss:$0 sm:$0xff]
    %214 = vmatprep.subr.mxu0 0.0
    %215 = vmatpush1.msra.mxu0 %v197
    %216 = vmatprep.subr.mxu0 0.0
    %217 = vmatpush1.msra.mxu0 %v198
    %218 = vmatprep.subr.mxu0 0.0
    %219 = vmatpush1.msra.mxu0 %v199
    %220 = vmatprep.subr.mxu0 0.0
    %221 = vmatpush1.msra.mxu0 %v200
    %222 = vmatprep.subr.mxu0 0.0
    %223 = vmatpush1.msra.mxu0 %v201
    %224 = vmatprep.subr.mxu0 0.0
    %225 = vmatpush1.msra.mxu0 %v202
    %226 = vmatprep.subr.mxu0 0.0
    %227 = vmatpush1.msra.mxu0 %v203
    %228 = vmatprep.subr.mxu0 0.0
    %229 = vmatpush1.msra.mxu0 %v204
    %230 = vmatprep.subr.mxu0 0.0
    %231 = vmatpush1.msra.mxu0 %v205
    %232 = vmatprep.subr.mxu0 0.0
    %233 = vmatpush1.msra.mxu0 %v206
    %234 = vmatprep.subr.mxu0 0.0
    %235 = vmatpush1.msra.mxu0 %v207
    %236 = vmatprep.subr.mxu0 0.0
    %237 = vmatpush1.msra.mxu0 %v208
    %238 = vmatprep.subr.mxu0 0.0
    %239 = vmatpush1.msra.mxu0 %v209
    %240 = vmatprep.subr.mxu0 0.0
    %241 = vmatpush1.msra.mxu0 %v210
    %242 = vmatprep.subr.mxu0 0.0
    %243 = vmatpush1.msra.mxu0 %v211
    %244 = vmatprep.subr.mxu0 0.0
    %245 = vmatpush1.msra.mxu0 %v212
    %246 = vmatprep.subr.mxu0 0.0
    %247 = vmatpush1.msra.mxu0 0.0
    %248 = vmatprep.subr.mxu0 0.0
    %249 = vmatpush1.msra.mxu0 0.0
    %250 = vmatprep.subr.mxu0 0.0
    %251 = vmatpush1.msra.mxu0 0.0
    %252 = vmatprep.subr.mxu0 0.0
    %253 = vmatpush1.msra.mxu0 0.0
    %254 = vmatprep.subr.mxu0 0.0
    %255 = vmatpush1.msra.mxu0 0.0
    %256 = vmatprep.subr.mxu0 0.0
    %257 = vmatpush1.msra.mxu0 0.0
    %258 = vmatprep.subr.mxu0 0.0
    %259 = vmatpush1.msra.mxu0 0.0
    %260 = vmatprep.subr.mxu0 0.0
    %261 = vmatpush1.msra.mxu0 0.0
    %262 = vmatprep.subr.mxu0 0.0
    %263 = vmatpush1.msra.mxu0 0.0
    %264 = vmatprep.subr.mxu0 0.0
    %265 = vmatpush1.msra.mxu0 0.0
    %266 = vmatprep.subr.mxu0 0.0
    %267 = vmatpush1.msra.mxu0 0.0
    %268 = vmatprep.subr.mxu0 0.0
    %269 = vmatpush1.msra.mxu0 0.0
    %270 = vmatprep.subr.mxu0 0.0
    %271 = vmatpush1.msra.mxu0 0.0
    %272 = vmatprep.subr.mxu0 0.0
    %273 = vmatpush1.msra.mxu0 0.0
    %274 = vmatprep.subr.mxu0 0.0
    %275 = vmatpush1.msra.mxu0 0.0
    %276 = vmatprep.subr.mxu0 0.0
    %277 = vmatpush1.msra.mxu0 0.0
    %278 = vmatprep.mubr.f32.mxu0 0.0
    %279 = vmatmul.mubr.f32.gmra.mrb[0].mxu0 %v109
    %v280 = vpop.f32.mrb[0].mxu0
    %v281 = vadd.f32 %v213, %v280
    %v282 = vpop.f32.mrb[0].mxu0
    %283 = vdwg.mxu0
    %v284 = vmax.f32 %v194, %v281
    %v285 = vld [vmem:[#allocation2 + $0x690] sm:$0xff]
    %v286 = vld [vmem:[#allocation2 + $0x6a0] sm:$0xff]
    %v287 = vld [vmem:[#allocation2 + $0x6b0] sm:$0xff]
    %v288 = vld [vmem:[#allocation2 + $0x6c0] sm:$0xff]
    %v289 = vld [vmem:[#allocation2 + $0x6d0] sm:$0xff]
    %v290 = vld [vmem:[#allocation2 + $0x6e0] sm:$0xff]
    %v291 = vld [vmem:[#allocation2 + $0x6f0] sm:$0xff]
    %v292 = vld [vmem:[#allocation2 + $0x700] sm:$0xff]
    %v293 = vld [vmem:[#allocation2 + $0x710] ss:$0 sm:$0xff]
    %v295 = vsel %vm35, %v284, 0
    %297 = vmatprep.subr.mxu0 0.0
    %298 = vmatpush1.msra.mxu0 %v285
    %299 = vmatprep.subr.mxu0 0.0
    %300 = vmatpush1.msra.mxu0 %v286
    %301 = vmatprep.subr.mxu0 0.0
    %302 = vmatpush1.msra.mxu0 %v287
    %303 = vmatprep.subr.mxu0 0.0
    %304 = vmatpush1.msra.mxu0 %v288
    %305 = vmatprep.subr.mxu0 0.0
    %306 = vmatpush1.msra.mxu0 %v289
    %307 = vmatprep.subr.mxu0 0.0
    %308 = vmatpush1.msra.mxu0 %v290
    %309 = vmatprep.subr.mxu0 0.0
    %310 = vmatpush1.msra.mxu0 %v291
    %311 = vmatprep.subr.mxu0 0.0
    %312 = vmatpush1.msra.mxu0 %v292
    %313 = vmatprep.subr.mxu0 0.0
    %314 = vmatpush1.msra.mxu0 0.0
    %315 = vmatprep.subr.mxu0 0.0
    %316 = vmatpush1.msra.mxu0 0.0
    %317 = vmatprep.subr.mxu0 0.0
    %318 = vmatpush1.msra.mxu0 0.0
    %319 = vmatprep.subr.mxu0 0.0
    %320 = vmatpush1.msra.mxu0 0.0
    %321 = vmatprep.subr.mxu0 0.0
    %322 = vmatpush1.msra.mxu0 0.0
    %323 = vmatprep.subr.mxu0 0.0
    %324 = vmatpush1.msra.mxu0 0.0
    %325 = vmatprep.subr.mxu0 0.0
    %326 = vmatpush1.msra.mxu0 0.0
    %327 = vmatprep.subr.mxu0 0.0
    %328 = vmatpush1.msra.mxu0 0.0
    %329 = vmatprep.subr.mxu0 0.0
    %330 = vmatpush1.msra.mxu0 0.0
    %331 = vmatprep.subr.mxu0 0.0
    %332 = vmatpush1.msra.mxu0 0.0
    %333 = vmatprep.subr.mxu0 0.0
    %334 = vmatpush1.msra.mxu0 0.0
    %335 = vmatprep.subr.mxu0 0.0
    %336 = vmatpush1.msra.mxu0 0.0
    %337 = vmatprep.subr.mxu0 0.0
    %338 = vmatpush1.msra.mxu0 0.0
    %339 = vmatprep.subr.mxu0 0.0
    %340 = vmatpush1.msra.mxu0 0.0
    %341 = vmatprep.subr.mxu0 0.0
    %342 = vmatpush1.msra.mxu0 0.0
    %343 = vmatprep.subr.mxu0 0.0
    %344 = vmatpush1.msra.mxu0 0.0
    %345 = vmatprep.subr.mxu0 0.0
    %346 = vmatpush1.msra.mxu0 0.0
    %347 = vmatprep.subr.mxu0 0.0
    %348 = vmatpush1.msra.mxu0 0.0
    %349 = vmatprep.subr.mxu0 0.0
    %350 = vmatpush1.msra.mxu0 0.0
    %351 = vmatprep.subr.mxu0 0.0
    %352 = vmatpush1.msra.mxu0 0.0
    %353 = vmatprep.subr.mxu0 0.0
    %354 = vmatpush1.msra.mxu0 0.0
    %355 = vmatprep.subr.mxu0 0.0
    %356 = vmatpush1.msra.mxu0 0.0
    %357 = vmatprep.subr.mxu0 0.0
    %358 = vmatpush1.msra.mxu0 0.0
    %359 = vmatprep.subr.mxu0 0.0
    %360 = vmatpush1.msra.mxu0 0.0
    %361 = vmatprep.mubr.f32.mxu0 0.0
    %362 = vmatmul.mubr.f32.gmra.mrb[0].mxu0 %v295
    %v363 = vpop.f32.mrb[0].mxu0
    %v364 = vadd.f32 %v293, %v363
    %v365 = vpop.f32.mrb[0].mxu0
    %366 = vdwg.mxu0
    %v367 = vld [vmem:[#allocation2] sm:$0xff]
    %v368 = vld [vmem:[#allocation2 + $0x8] sm:$0xff]
    %v369 = vld [vmem:[#allocation2 + $0x10] sm:$0xff]
    %v370 = vld [vmem:[#allocation2 + $0x18] sm:$0xff]
    %v371 = vld [vmem:[#allocation2 + $0x20] sm:$0xff]
    %v372 = vld [vmem:[#allocation2 + $0x28] sm:$0xff]
    %v373 = vld [vmem:[#allocation2 + $0x30] sm:$0xff]
    %v374 = vld [vmem:[#allocation2 + $0x38] sm:$0xff]
    %v375 = vld [vmem:[#allocation2 + $0x40] sm:$0xff]
    %v376 = vld [vmem:[#allocation2 + $0x48] sm:$0xff]
    %v377 = vld [vmem:[#allocation2 + $0x50] sm:$0xff]
    %v378 = vld [vmem:[#allocation2 + $0x58] sm:$0xff]
    %v379 = vld [vmem:[#allocation2 + $0x60] sm:$0xff]
    %v380 = vld [vmem:[#allocation2 + $0x68] sm:$0xff]
    %v381 = vld [vmem:[#allocation2 + $0x70] sm:$0xff]
    %v382 = vld [vmem:[#allocation2 + $0x78] sm:$0xff]
    %v383 = vld [vmem:[#allocation2 + $0x80] sm:$0xff]
    %v384 = vld [vmem:[#allocation2 + $0x88] sm:$0xff]
    %v385 = vld [vmem:[#allocation2 + $0x90] sm:$0xff]
    %v386 = vld [vmem:[#allocation2 + $0x98] sm:$0xff]
    %v387 = vld [vmem:[#allocation2 + $0xa0] sm:$0xff]
    %v388 = vld [vmem:[#allocation2 + $0xa8] sm:$0xff]
    %v389 = vld [vmem:[#allocation2 + $0xb0] sm:$0xff]
    %v390 = vld [vmem:[#allocation2 + $0xb8] sm:$0xff]
    %v391 = vld [vmem:[#allocation2 + $0xc0] sm:$0xff]
    %v392 = vld [vmem:[#allocation2 + $0xc8] sm:$0xff]
    %v393 = vld [vmem:[#allocation2 + $0xd0] sm:$0xff]
    %v394 = vld [vmem:[#allocation2 + $0xd8] sm:$0xff]
    %v395 = vld [vmem:[#allocation2 + $0xe0] sm:$0xff]
    %v396 = vld [vmem:[#allocation2 + $0xe8] sm:$0xff]
    %v397 = vld [vmem:[#allocation2 + $0xf0] sm:$0xff]
    %v398 = vld [vmem:[#allocation2 + $0xf8] sm:$0xff]
    %s399 = scalar_lea.vmem [#allocation2], 256
    %v400 = vld [vmem:[%s399] ss:$8 sm:$0x3]
    %v402 = vlaneseq
    %v403 = vshrl.u32 %v402, 7
    %v404 = vsub.s32 0, %v403
    %v405 = vrot.slane %v400, %v404
    %v406 = vlaneseq
    %v407 = vshrl.u32 %v406, 7
    %v408 = vsub.s32 1, %v407
    %v409 = vrot.slane %v400, %v408
    %412 = vmatprep.subr.mxu0 %v368
    %413 = vmatpush1.msra.mxu0 %v367
    %414 = vmatprep.subr.mxu0 %v370
    %415 = vmatpush1.msra.mxu0 %v369
    %416 = vmatprep.subr.mxu0 %v372
    %417 = vmatpush1.msra.mxu0 %v371
    %418 = vmatprep.subr.mxu0 %v374
    %419 = vmatpush1.msra.mxu0 %v373
    %420 = vmatprep.subr.mxu0 %v376
    %421 = vmatpush1.msra.mxu0 %v375
    %422 = vmatprep.subr.mxu0 %v378
    %423 = vmatpush1.msra.mxu0 %v377
    %424 = vmatprep.subr.mxu0 %v380
    %425 = vmatpush1.msra.mxu0 %v379
    %426 = vmatprep.subr.mxu0 %v382
    %427 = vmatpush1.msra.mxu0 %v381
    %428 = vmatprep.subr.mxu0 %v384
    %429 = vmatpush1.msra.mxu0 %v383
    %430 = vmatprep.subr.mxu0 %v386
    %431 = vmatpush1.msra.mxu0 %v385
    %432 = vmatprep.subr.mxu0 %v388
    %433 = vmatpush1.msra.mxu0 %v387
    %434 = vmatprep.subr.mxu0 %v390
    %435 = vmatpush1.msra.mxu0 %v389
    %436 = vmatprep.subr.mxu0 %v392
    %437 = vmatpush1.msra.mxu0 %v391
    %438 = vmatprep.subr.mxu0 %v394
    %439 = vmatpush1.msra.mxu0 %v393
    %440 = vmatprep.subr.mxu0 %v396
    %441 = vmatpush1.msra.mxu0 %v395
    %442 = vmatprep.subr.mxu0 %v398
    %443 = vmatpush1.msra.mxu0 %v397
    %444 = vmatprep.subr.mxu0 0.0
    %445 = vmatpush1.msra.mxu0 0.0
    %446 = vmatprep.subr.mxu0 0.0
    %447 = vmatpush1.msra.mxu0 0.0
    %448 = vmatprep.subr.mxu0 0.0
    %449 = vmatpush1.msra.mxu0 0.0
    %450 = vmatprep.subr.mxu0 0.0
    %451 = vmatpush1.msra.mxu0 0.0
    %452 = vmatprep.subr.mxu0 0.0
    %453 = vmatpush1.msra.mxu0 0.0
    %454 = vmatprep.subr.mxu0 0.0
    %455 = vmatpush1.msra.mxu0 0.0
    %456 = vmatprep.subr.mxu0 0.0
    %457 = vmatpush1.msra.mxu0 0.0
    %458 = vmatprep.subr.mxu0 0.0
    %459 = vmatpush1.msra.mxu0 0.0
    %460 = vmatprep.subr.mxu0 0.0
    %461 = vmatpush1.msra.mxu0 0.0
    %462 = vmatprep.subr.mxu0 0.0
    %463 = vmatpush1.msra.mxu0 0.0
    %464 = vmatprep.subr.mxu0 0.0
    %465 = vmatpush1.msra.mxu0 0.0
    %466 = vmatprep.subr.mxu0 0.0
    %467 = vmatpush1.msra.mxu0 0.0
    %468 = vmatprep.subr.mxu0 0.0
    %469 = vmatpush1.msra.mxu0 0.0
    %470 = vmatprep.subr.mxu0 0.0
    %471 = vmatpush1.msra.mxu0 0.0
    %472 = vmatprep.subr.mxu0 0.0
    %473 = vmatpush1.msra.mxu0 0.0
    %474 = vmatprep.subr.mxu0 0.0
    %475 = vmatpush1.msra.mxu0 0.0
    %476 = vmatprep.mubr.f32.mxu0 0.0
    %477 = vmatmul.mubr.f32.gmra.mrb[0].mxu0 %v109
    %v478 = vpop.f32.mrb[0].mxu0
    %v479 = vadd.f32 %v405, %v478
    %v480 = vpop.f32.mrb[0].mxu0
    %v481 = vadd.f32 %v409, %v480
    %482 = vdwg.mxu0
    %v483 = vmax.f32 %v479, 0.0
    %v484 = vmax.f32 %v481, 0.0
    %v485 = vld [vmem:[#allocation2 + $0x110] sm:$0xff]
    %v486 = vld [vmem:[#allocation2 + $0x120] sm:$0xff]
    %v487 = vld [vmem:[#allocation2 + $0x130] sm:$0xff]
    %v488 = vld [vmem:[#allocation2 + $0x140] sm:$0xff]
    %v489 = vld [vmem:[#allocation2 + $0x150] sm:$0xff]
    %v490 = vld [vmem:[#allocation2 + $0x160] sm:$0xff]
    %v491 = vld [vmem:[#allocation2 + $0x170] sm:$0xff]
    %v492 = vld [vmem:[#allocation2 + $0x180] sm:$0xff]
    %v493 = vld [vmem:[#allocation2 + $0x190] sm:$0xff]
    %v494 = vld [vmem:[#allocation2 + $0x1a0] sm:$0xff]
    %v495 = vld [vmem:[#allocation2 + $0x1b0] sm:$0xff]
    %v496 = vld [vmem:[#allocation2 + $0x1c0] sm:$0xff]
    %v497 = vld [vmem:[#allocation2 + $0x1d0] sm:$0xff]
    %v498 = vld [vmem:[#allocation2 + $0x1e0] sm:$0xff]
    %v499 = vld [vmem:[#allocation2 + $0x1f0] sm:$0xff]
    %v500 = vld [vmem:[#allocation2 + $0x200] sm:$0xff]
    %v501 = vld [vmem:[#allocation2 + $0x210] sm:$0xff]
    %v502 = vld [vmem:[#allocation2 + $0x220] sm:$0xff]
    %v503 = vld [vmem:[#allocation2 + $0x230] sm:$0xff]
    %v504 = vld [vmem:[#allocation2 + $0x240] sm:$0xff]
    %v505 = vld [vmem:[#allocation2 + $0x250] sm:$0xff]
    %v506 = vld [vmem:[#allocation2 + $0x260] sm:$0xff]
    %v507 = vld [vmem:[#allocation2 + $0x270] sm:$0xff]
    %v508 = vld [vmem:[#allocation2 + $0x280] sm:$0xff]
    %v509 = vld [vmem:[#allocation2 + $0x290] sm:$0xff]
    %v510 = vld [vmem:[#allocation2 + $0x2a0] sm:$0xff]
    %v511 = vld [vmem:[#allocation2 + $0x2b0] sm:$0xff]
    %v512 = vld [vmem:[#allocation2 + $0x2c0] sm:$0xff]
    %v513 = vld [vmem:[#allocation2 + $0x2d0] sm:$0xff]
    %v514 = vld [vmem:[#allocation2 + $0x2e0] sm:$0xff]
    %v515 = vld [vmem:[#allocation2 + $0x2f0] sm:$0xff]
    %v516 = vld [vmem:[#allocation2 + $0x300] sm:$0xff]
    %v517 = vld [vmem:[#allocation2 + $0x310] ss:$0 sm:$0xff]
    %518 = vmatprep.subr.mxu0 0.0
    %519 = vmatpush1.msra.mxu0 %v485
    %520 = vmatprep.subr.mxu0 0.0
    %521 = vmatpush1.msra.mxu0 %v486
    %522 = vmatprep.subr.mxu0 0.0
    %523 = vmatpush1.msra.mxu0 %v487
    %524 = vmatprep.subr.mxu0 0.0
    %525 = vmatpush1.msra.mxu0 %v488
    %526 = vmatprep.subr.mxu0 0.0
    %527 = vmatpush1.msra.mxu0 %v489
    %528 = vmatprep.subr.mxu0 0.0
    %529 = vmatpush1.msra.mxu0 %v490
    %530 = vmatprep.subr.mxu0 0.0
    %531 = vmatpush1.msra.mxu0 %v491
    %532 = vmatprep.subr.mxu0 0.0
    %533 = vmatpush1.msra.mxu0 %v492
    %534 = vmatprep.subr.mxu0 0.0
    %535 = vmatpush1.msra.mxu0 %v493
    %536 = vmatprep.subr.mxu0 0.0
    %537 = vmatpush1.msra.mxu0 %v494
    %538 = vmatprep.subr.mxu0 0.0
    %539 = vmatpush1.msra.mxu0 %v495
    %540 = vmatprep.subr.mxu0 0.0
    %541 = vmatpush1.msra.mxu0 %v496
    %542 = vmatprep.subr.mxu0 0.0
    %543 = vmatpush1.msra.mxu0 %v497
    %544 = vmatprep.subr.mxu0 0.0
    %545 = vmatpush1.msra.mxu0 %v498
    %546 = vmatprep.subr.mxu0 0.0
    %547 = vmatpush1.msra.mxu0 %v499
    %548 = vmatprep.subr.mxu0 0.0
    %549 = vmatpush1.msra.mxu0 %v500
    %550 = vmatprep.subr.mxu0 0.0
    %551 = vmatpush1.msra.mxu0 %v501
    %552 = vmatprep.subr.mxu0 0.0
    %553 = vmatpush1.msra.mxu0 %v502
    %554 = vmatprep.subr.mxu0 0.0
    %555 = vmatpush1.msra.mxu0 %v503
    %556 = vmatprep.subr.mxu0 0.0
    %557 = vmatpush1.msra.mxu0 %v504
    %558 = vmatprep.subr.mxu0 0.0
    %559 = vmatpush1.msra.mxu0 %v505
    %560 = vmatprep.subr.mxu0 0.0
    %561 = vmatpush1.msra.mxu0 %v506
    %562 = vmatprep.subr.mxu0 0.0
    %563 = vmatpush1.msra.mxu0 %v507
    %564 = vmatprep.subr.mxu0 0.0
    %565 = vmatpush1.msra.mxu0 %v508
    %566 = vmatprep.subr.mxu0 0.0
    %567 = vmatpush1.msra.mxu0 %v509
    %568 = vmatprep.subr.mxu0 0.0
    %569 = vmatpush1.msra.mxu0 %v510
    %570 = vmatprep.subr.mxu0 0.0
    %571 = vmatpush1.msra.mxu0 %v511
    %572 = vmatprep.subr.mxu0 0.0
    %573 = vmatpush1.msra.mxu0 %v512
    %574 = vmatprep.subr.mxu0 0.0
    %575 = vmatpush1.msra.mxu0 %v513
    %576 = vmatprep.subr.mxu0 0.0
    %577 = vmatpush1.msra.mxu0 %v514
    %578 = vmatprep.subr.mxu0 0.0
    %579 = vmatpush1.msra.mxu0 %v515
    %580 = vmatprep.subr.mxu0 0.0
    %581 = vmatpush1.msra.mxu0 %v516
    %582 = vmatprep.mubr.f32.mxu0 %v484
    %583 = vmatmul.mubr.f32.gmra.mrb[0].mxu0 %v483
    %v584 = vpop.f32.mrb[0].mxu0
    %v585 = vadd.f32 %v517, %v584
    %v586 = vpop.f32.mrb[0].mxu0
    %587 = vdwg.mxu0
    %v588 = vld [vmem:[#allocation2 + $0x540] sm:$0xff]
    %v589 = vld [vmem:[#allocation2 + $0x550] sm:$0xff]
    %v590 = vld [vmem:[#allocation2 + $0x560] sm:$0xff]
    %v591 = vld [vmem:[#allocation2 + $0x570] sm:$0xff]
    %v592 = vld [vmem:[#allocation2 + $0x580] sm:$0xff]
    %v593 = vld [vmem:[#allocation2 + $0x590] sm:$0xff]
    %v594 = vld [vmem:[#allocation2 + $0x5a0] sm:$0xff]
    %v595 = vld [vmem:[#allocation2 + $0x5b0] sm:$0xff]
    %v596 = vld [vmem:[#allocation2 + $0x5c0] sm:$0xff]
    %v597 = vld [vmem:[#allocation2 + $0x5d0] sm:$0xff]
    %v598 = vld [vmem:[#allocation2 + $0x5e0] sm:$0xff]
    %v599 = vld [vmem:[#allocation2 + $0x5f0] sm:$0xff]
    %v600 = vld [vmem:[#allocation2 + $0x600] sm:$0xff]
    %v601 = vld [vmem:[#allocation2 + $0x610] sm:$0xff]
    %v602 = vld [vmem:[#allocation2 + $0x620] sm:$0xff]
    %v603 = vld [vmem:[#allocation2 + $0x630] sm:$0xff]
    %604 = vmatprep.subr.mxu0 0.0
    %605 = vmatpush1.msra.mxu0 %v588
    %606 = vmatprep.subr.mxu0 0.0
    %607 = vmatpush1.msra.mxu0 %v589
    %608 = vmatprep.subr.mxu0 0.0
    %609 = vmatpush1.msra.mxu0 %v590
    %610 = vmatprep.subr.mxu0 0.0
    %611 = vmatpush1.msra.mxu0 %v591
    %612 = vmatprep.subr.mxu0 0.0
    %613 = vmatpush1.msra.mxu0 %v592
    %614 = vmatprep.subr.mxu0 0.0
    %615 = vmatpush1.msra.mxu0 %v593
    %616 = vmatprep.subr.mxu0 0.0
    %617 = vmatpush1.msra.mxu0 %v594
    %618 = vmatprep.subr.mxu0 0.0
    %619 = vmatpush1.msra.mxu0 %v595
    %620 = vmatprep.subr.mxu0 0.0
    %621 = vmatpush1.msra.mxu0 %v596
    %622 = vmatprep.subr.mxu0 0.0
    %623 = vmatpush1.msra.mxu0 %v597
    %624 = vmatprep.subr.mxu0 0.0
    %625 = vmatpush1.msra.mxu0 %v598
    %626 = vmatprep.subr.mxu0 0.0
    %627 = vmatpush1.msra.mxu0 %v599
    %628 = vmatprep.subr.mxu0 0.0
    %629 = vmatpush1.msra.mxu0 %v600
    %630 = vmatprep.subr.mxu0 0.0
    %631 = vmatpush1.msra.mxu0 %v601
    %632 = vmatprep.subr.mxu0 0.0
    %633 = vmatpush1.msra.mxu0 %v602
    %634 = vmatprep.subr.mxu0 0.0
    %635 = vmatpush1.msra.mxu0 %v603
    %636 = vmatprep.subr.mxu0 0.0
    %637 = vmatpush1.msra.mxu0 0.0
    %638 = vmatprep.subr.mxu0 0.0
    %639 = vmatpush1.msra.mxu0 0.0
    %640 = vmatprep.subr.mxu0 0.0
    %641 = vmatpush1.msra.mxu0 0.0
    %642 = vmatprep.subr.mxu0 0.0
    %643 = vmatpush1.msra.mxu0 0.0
    %644 = vmatprep.subr.mxu0 0.0
    %645 = vmatpush1.msra.mxu0 0.0
    %646 = vmatprep.subr.mxu0 0.0
    %647 = vmatpush1.msra.mxu0 0.0
    %648 = vmatprep.subr.mxu0 0.0
    %649 = vmatpush1.msra.mxu0 0.0
    %650 = vmatprep.subr.mxu0 0.0
    %651 = vmatpush1.msra.mxu0 0.0
    %652 = vmatprep.subr.mxu0 0.0
    %653 = vmatpush1.msra.mxu0 0.0
    %654 = vmatprep.subr.mxu0 0.0
    %655 = vmatpush1.msra.mxu0 0.0
    %656 = vmatprep.subr.mxu0 0.0
    %657 = vmatpush1.msra.mxu0 0.0
    %658 = vmatprep.subr.mxu0 0.0
    %659 = vmatpush1.msra.mxu0 0.0
    %660 = vmatprep.subr.mxu0 0.0
    %661 = vmatpush1.msra.mxu0 0.0
    %662 = vmatprep.subr.mxu0 0.0
    %663 = vmatpush1.msra.mxu0 0.0
    %664 = vmatprep.subr.mxu0 0.0
    %665 = vmatpush1.msra.mxu0 0.0
    %666 = vmatprep.subr.mxu0 0.0
    %667 = vmatpush1.msra.mxu0 0.0
    %668 = vmatprep.mubr.f32.mxu0 0.0
    %669 = vmatmul.mubr.f32.gmra.mrb[0].mxu0 %v585
    %v670 = vpop.f32.mrb[0].mxu0
    %v671 = vadd.f32 0.0, %v670
    %v672 = vpop.f32.mrb[0].mxu0
    %673 = vdwg.mxu0
    %v674 = vld [vmem:[#allocation2 + $0x660] sm:$0xff]
    %v675 = vld [vmem:[#allocation2 + $0x670] sm:$0xff]
    %vm676 = vcmask 130048
    %v678 = vsel %vm676, %v671, 0
    %680 = vmatprep.subr.mxu0 0.0
    %681 = vmatpush1.msra.mxu0 %v674
    %682 = vmatprep.subr.mxu0 0.0
    %683 = vmatpush1.msra.mxu0 %v675
    %684 = vmatprep.subr.mxu0 0.0
    %685 = vmatpush1.msra.mxu0 0.0
    %686 = vmatprep.subr.mxu0 0.0
    %687 = vmatpush1.msra.mxu0 0.0
    %688 = vmatprep.subr.mxu0 0.0
    %689 = vmatpush1.msra.mxu0 0.0
    %690 = vmatprep.subr.mxu0 0.0
    %691 = vmatpush1.msra.mxu0 0.0
    %692 = vmatprep.subr.mxu0 0.0
    %693 = vmatpush1.msra.mxu0 0.0
    %694 = vmatprep.subr.mxu0 0.0
    %695 = vmatpush1.msra.mxu0 0.0
    %696 = vmatprep.subr.mxu0 0.0
    %697 = vmatpush1.msra.mxu0 0.0
    %698 = vmatprep.subr.mxu0 0.0
    %699 = vmatpush1.msra.mxu0 0.0
    %700 = vmatprep.subr.mxu0 0.0
    %701 = vmatpush1.msra.mxu0 0.0
    %702 = vmatprep.subr.mxu0 0.0
    %703 = vmatpush1.msra.mxu0 0.0
    %704 = vmatprep.subr.mxu0 0.0
    %705 = vmatpush1.msra.mxu0 0.0
    %706 = vmatprep.subr.mxu0 0.0
    %707 = vmatpush1.msra.mxu0 0.0
    %708 = vmatprep.subr.mxu0 0.0
    %709 = vmatpush1.msra.mxu0 0.0
    %710 = vmatprep.subr.mxu0 0.0
    %711 = vmatpush1.msra.mxu0 0.0
    %712 = vmatprep.subr.mxu0 0.0
    %713 = vmatpush1.msra.mxu0 0.0
    %714 = vmatprep.subr.mxu0 0.0
    %715 = vmatpush1.msra.mxu0 0.0
    %716 = vmatprep.subr.mxu0 0.0
    %717 = vmatpush1.msra.mxu0 0.0
    %718 = vmatprep.subr.mxu0 0.0
    %719 = vmatpush1.msra.mxu0 0.0
    %720 = vmatprep.subr.mxu0 0.0
    %721 = vmatpush1.msra.mxu0 0.0
    %722 = vmatprep.subr.mxu0 0.0
    %723 = vmatpush1.msra.mxu0 0.0
    %724 = vmatprep.subr.mxu0 0.0
    %725 = vmatpush1.msra.mxu0 0.0
    %726 = vmatprep.subr.mxu0 0.0
    %727 = vmatpush1.msra.mxu0 0.0
    %728 = vmatprep.subr.mxu0 0.0
    %729 = vmatpush1.msra.mxu0 0.0
    %730 = vmatprep.subr.mxu0 0.0
    %731 = vmatpush1.msra.mxu0 0.0
    %732 = vmatprep.subr.mxu0 0.0
    %733 = vmatpush1.msra.mxu0 0.0
    %734 = vmatprep.subr.mxu0 0.0
    %735 = vmatpush1.msra.mxu0 0.0
    %736 = vmatprep.subr.mxu0 0.0
    %737 = vmatpush1.msra.mxu0 0.0
    %738 = vmatprep.subr.mxu0 0.0
    %739 = vmatpush1.msra.mxu0 0.0
    %740 = vmatprep.subr.mxu0 0.0
    %741 = vmatpush1.msra.mxu0 0.0
    %742 = vmatprep.subr.mxu0 0.0
    %743 = vmatpush1.msra.mxu0 0.0
    %744 = vmatprep.mubr.f32.mxu0 0.0
    %745 = vmatmul.mubr.f32.gmra.mrb[0].mxu0 %v678
    %v746 = vpop.f32.mrb[0].mxu0
    %v747 = vadd.f32 0.0, %v746
    %v748 = vpop.f32.mrb[0].mxu0
    %749 = vdwg.mxu0
    %v750 = vmax.f32 %v747, 0.0
    %v751 = vld [vmem:[#allocation2 + $0x680] sm:$0xf]
    %vm752 = vcmask 31744
    %v754 = vsel %vm752, %v750, 0
    %vm756 = vcmask 1043456
    %v758 = vsel %vm756, %v751, 0
    %760 = vmatprep.subr.mxu0 0.0
    %761 = vmatpush1.msra.mxu0 %v758
    %762 = vmatprep.subr.mxu0 0.0
    %763 = vmatpush1.msra.mxu0 0.0
    %764 = vmatprep.subr.mxu0 0.0
    %765 = vmatpush1.msra.mxu0 0.0
    %766 = vmatprep.subr.mxu0 0.0
    %767 = vmatpush1.msra.mxu0 0.0
    %768 = vmatprep.subr.mxu0 0.0
    %769 = vmatpush1.msra.mxu0 0.0
    %770 = vmatprep.subr.mxu0 0.0
    %771 = vmatpush1.msra.mxu0 0.0
    %772 = vmatprep.subr.mxu0 0.0
    %773 = vmatpush1.msra.mxu0 0.0
    %774 = vmatprep.subr.mxu0 0.0
    %775 = vmatpush1.msra.mxu0 0.0
    %776 = vmatprep.subr.mxu0 0.0
    %777 = vmatpush1.msra.mxu0 0.0
    %778 = vmatprep.subr.mxu0 0.0
    %779 = vmatpush1.msra.mxu0 0.0
    %780 = vmatprep.subr.mxu0 0.0
    %781 = vmatpush1.msra.mxu0 0.0
    %782 = vmatprep.subr.mxu0 0.0
    %783 = vmatpush1.msra.mxu0 0.0
    %784 = vmatprep.subr.mxu0 0.0
    %785 = vmatpush1.msra.mxu0 0.0
    %786 = vmatprep.subr.mxu0 0.0
    %787 = vmatpush1.msra.mxu0 0.0
    %788 = vmatprep.subr.mxu0 0.0
    %789 = vmatpush1.msra.mxu0 0.0
    %790 = vmatprep.subr.mxu0 0.0
    %791 = vmatpush1.msra.mxu0 0.0
    %792 = vmatprep.subr.mxu0 0.0
    %793 = vmatpush1.msra.mxu0 0.0
    %794 = vmatprep.subr.mxu0 0.0
    %795 = vmatpush1.msra.mxu0 0.0
    %796 = vmatprep.subr.mxu0 0.0
    %797 = vmatpush1.msra.mxu0 0.0
    %798 = vmatprep.subr.mxu0 0.0
    %799 = vmatpush1.msra.mxu0 0.0
    %800 = vmatprep.subr.mxu0 0.0
    %801 = vmatpush1.msra.mxu0 0.0
    %802 = vmatprep.subr.mxu0 0.0
    %803 = vmatpush1.msra.mxu0 0.0
    %804 = vmatprep.subr.mxu0 0.0
    %805 = vmatpush1.msra.mxu0 0.0
    %806 = vmatprep.subr.mxu0 0.0
    %807 = vmatpush1.msra.mxu0 0.0
    %808 = vmatprep.subr.mxu0 0.0
    %809 = vmatpush1.msra.mxu0 0.0
    %810 = vmatprep.subr.mxu0 0.0
    %811 = vmatpush1.msra.mxu0 0.0
    %812 = vmatprep.subr.mxu0 0.0
    %813 = vmatpush1.msra.mxu0 0.0
    %814 = vmatprep.subr.mxu0 0.0
    %815 = vmatpush1.msra.mxu0 0.0
    %816 = vmatprep.subr.mxu0 0.0
    %817 = vmatpush1.msra.mxu0 0.0
    %818 = vmatprep.subr.mxu0 0.0
    %819 = vmatpush1.msra.mxu0 0.0
    %820 = vmatprep.subr.mxu0 0.0
    %821 = vmatpush1.msra.mxu0 0.0
    %822 = vmatprep.subr.mxu0 0.0
    %823 = vmatpush1.msra.mxu0 0.0
    %824 = vmatprep.mubr.f32.mxu0 0.0
    %825 = vmatmul.mubr.f32.gmra.mrb[0].mxu0 %v754
    %v826 = vpop.f32.mrb[0].mxu0
    %v827 = vadd.f32 0.0, %v826
    %v828 = vpop.f32.mrb[0].mxu0
    %829 = vdwg.mxu0
    %v830 = vsub.f32 0.0, %v827
    %v831 = vmul.f32 %v830, 1.442695
    %v832 = vpow.pop %v831
    %v833 = vadd.f32 %v832, 1.0
    %v834 = vrcp.pop %v833
    %v835 = vld [vmem:[#allocation2 + $0x640] sm:$0xff]
    %v836 = vld [vmem:[#allocation2 + $0x650] sm:$0xff]
    %v838 = vsel %vm676, %v834, 0
    %840 = vmatprep.subr.mxu0 0.0
    %841 = vmatpush1.msra.mxu0 %v835
    %842 = vmatprep.subr.mxu0 0.0
    %843 = vmatpush1.msra.mxu0 %v836
    %844 = vmatprep.subr.mxu0 0.0
    %845 = vmatpush1.msra.mxu0 0.0
    %846 = vmatprep.subr.mxu0 0.0
    %847 = vmatpush1.msra.mxu0 0.0
    %848 = vmatprep.subr.mxu0 0.0
    %849 = vmatpush1.msra.mxu0 0.0
    %850 = vmatprep.subr.mxu0 0.0
    %851 = vmatpush1.msra.mxu0 0.0
    %852 = vmatprep.subr.mxu0 0.0
    %853 = vmatpush1.msra.mxu0 0.0
    %854 = vmatprep.subr.mxu0 0.0
    %855 = vmatpush1.msra.mxu0 0.0
    %856 = vmatprep.subr.mxu0 0.0
    %857 = vmatpush1.msra.mxu0 0.0
    %858 = vmatprep.subr.mxu0 0.0
    %859 = vmatpush1.msra.mxu0 0.0
    %860 = vmatprep.subr.mxu0 0.0
    %861 = vmatpush1.msra.mxu0 0.0
    %862 = vmatprep.subr.mxu0 0.0
    %863 = vmatpush1.msra.mxu0 0.0
    %864 = vmatprep.subr.mxu0 0.0
    %865 = vmatpush1.msra.mxu0 0.0
    %866 = vmatprep.subr.mxu0 0.0
    %867 = vmatpush1.msra.mxu0 0.0
    %868 = vmatprep.subr.mxu0 0.0
    %869 = vmatpush1.msra.mxu0 0.0
    %870 = vmatprep.subr.mxu0 0.0
    %871 = vmatpush1.msra.mxu0 0.0
    %872 = vmatprep.subr.mxu0 0.0
    %873 = vmatpush1.msra.mxu0 0.0
    %874 = vmatprep.subr.mxu0 0.0
    %875 = vmatpush1.msra.mxu0 0.0
    %876 = vmatprep.subr.mxu0 0.0
    %877 = vmatpush1.msra.mxu0 0.0
    %878 = vmatprep.subr.mxu0 0.0
    %879 = vmatpush1.msra.mxu0 0.0
    %880 = vmatprep.subr.mxu0 0.0
    %881 = vmatpush1.msra.mxu0 0.0
    %882 = vmatprep.subr.mxu0 0.0
    %883 = vmatpush1.msra.mxu0 0.0
    %884 = vmatprep.subr.mxu0 0.0
    %885 = vmatpush1.msra.mxu0 0.0
    %886 = vmatprep.subr.mxu0 0.0
    %887 = vmatpush1.msra.mxu0 0.0
    %888 = vmatprep.subr.mxu0 0.0
    %889 = vmatpush1.msra.mxu0 0.0
    %890 = vmatprep.subr.mxu0 0.0
    %891 = vmatpush1.msra.mxu0 0.0
    %892 = vmatprep.subr.mxu0 0.0
    %893 = vmatpush1.msra.mxu0 0.0
    %894 = vmatprep.subr.mxu0 0.0
    %895 = vmatpush1.msra.mxu0 0.0
    %896 = vmatprep.subr.mxu0 0.0
    %897 = vmatpush1.msra.mxu0 0.0
    %898 = vmatprep.subr.mxu0 0.0
    %899 = vmatpush1.msra.mxu0 0.0
    %900 = vmatprep.subr.mxu0 0.0
    %901 = vmatpush1.msra.mxu0 0.0
    %902 = vmatprep.subr.mxu0 0.0
    %903 = vmatpush1.msra.mxu0 0.0
    %904 = vmatprep.mubr.f32.mxu0 0.0
    %905 = vmatmul.mubr.f32.gmra.mrb[0].mxu0 %v838
    %v906 = vpop.f32.mrb[0].mxu0
    %v907 = vadd.f32 0.0, %v906
    %v908 = vpop.f32.mrb[0].mxu0
    %909 = vdwg.mxu0
    %v910 = vmul.f32 %v585, %v907
    %v911 = vadd.f32 %v910, %v364
    %v912 = vld [vmem:[#allocation2 + $0x940] sm:$0xff]
    %v913 = vld [vmem:[#allocation2 + $0x950] sm:$0xff]
    %v914 = vld [vmem:[#allocation2 + $0x960] sm:$0xff]
    %v915 = vld [vmem:[#allocation2 + $0x970] sm:$0xff]
    %v916 = vld [vmem:[#allocation2 + $0x980] sm:$0xff]
    %v917 = vld [vmem:[#allocation2 + $0x990] sm:$0xff]
    %v918 = vld [vmem:[#allocation2 + $0x9a0] sm:$0xff]
    %v919 = vld [vmem:[#allocation2 + $0x9b0] sm:$0xff]
    %v920 = vld [vmem:[#allocation2 + $0x9c0] sm:$0xff]
    %v921 = vld [vmem:[#allocation2 + $0x9d0] sm:$0xff]
    %v922 = vld [vmem:[#allocation2 + $0x9e0] sm:$0xff]
    %v923 = vld [vmem:[#allocation2 + $0x9f0] sm:$0xff]
    %v924 = vld [vmem:[#allocation2 + $0xa00] sm:$0xff]
    %v925 = vld [vmem:[#allocation2 + $0xa10] sm:$0xff]
    %v926 = vld [vmem:[#allocation2 + $0xa20] sm:$0xff]
    %v927 = vld [vmem:[#allocation2 + $0xa30] sm:$0xff]
    %v928 = vld [vmem:[#allocation2 + $0xb40] ss:$0 sm:$0xff]
    %929 = vmatprep.subr.mxu0 0.0
    %930 = vmatpush1.msra.mxu0 %v912
    %931 = vmatprep.subr.mxu0 0.0
    %932 = vmatpush1.msra.mxu0 %v913
    %933 = vmatprep.subr.mxu0 0.0
    %934 = vmatpush1.msra.mxu0 %v914
    %935 = vmatprep.subr.mxu0 0.0
    %936 = vmatpush1.msra.mxu0 %v915
    %937 = vmatprep.subr.mxu0 0.0
    %938 = vmatpush1.msra.mxu0 %v916
    %939 = vmatprep.subr.mxu0 0.0
    %940 = vmatpush1.msra.mxu0 %v917
    %941 = vmatprep.subr.mxu0 0.0
    %942 = vmatpush1.msra.mxu0 %v918
    %943 = vmatprep.subr.mxu0 0.0
    %944 = vmatpush1.msra.mxu0 %v919
    %945 = vmatprep.subr.mxu0 0.0
    %946 = vmatpush1.msra.mxu0 %v920
    %947 = vmatprep.subr.mxu0 0.0
    %948 = vmatpush1.msra.mxu0 %v921
    %949 = vmatprep.subr.mxu0 0.0
    %950 = vmatpush1.msra.mxu0 %v922
    %951 = vmatprep.subr.mxu0 0.0
    %952 = vmatpush1.msra.mxu0 %v923
    %953 = vmatprep.subr.mxu0 0.0
    %954 = vmatpush1.msra.mxu0 %v924
    %955 = vmatprep.subr.mxu0 0.0
    %956 = vmatpush1.msra.mxu0 %v925
    %957 = vmatprep.subr.mxu0 0.0
    %958 = vmatpush1.msra.mxu0 %v926
    %959 = vmatprep.subr.mxu0 0.0
    %960 = vmatpush1.msra.mxu0 %v927
    %961 = vmatprep.subr.mxu0 0.0
    %962 = vmatpush1.msra.mxu0 0.0
    %963 = vmatprep.subr.mxu0 0.0
    %964 = vmatpush1.msra.mxu0 0.0
    %965 = vmatprep.subr.mxu0 0.0
    %966 = vmatpush1.msra.mxu0 0.0
    %967 = vmatprep.subr.mxu0 0.0
    %968 = vmatpush1.msra.mxu0 0.0
    %969 = vmatprep.subr.mxu0 0.0
    %970 = vmatpush1.msra.mxu0 0.0
    %971 = vmatprep.subr.mxu0 0.0
    %972 = vmatpush1.msra.mxu0 0.0
    %973 = vmatprep.subr.mxu0 0.0
    %974 = vmatpush1.msra.mxu0 0.0
    %975 = vmatprep.subr.mxu0 0.0
    %976 = vmatpush1.msra.mxu0 0.0
    %977 = vmatprep.subr.mxu0 0.0
    %978 = vmatpush1.msra.mxu0 0.0
    %979 = vmatprep.subr.mxu0 0.0
    %980 = vmatpush1.msra.mxu0 0.0
    %981 = vmatprep.subr.mxu0 0.0
    %982 = vmatpush1.msra.mxu0 0.0
    %983 = vmatprep.subr.mxu0 0.0
    %984 = vmatpush1.msra.mxu0 0.0
    %985 = vmatprep.subr.mxu0 0.0
    %986 = vmatpush1.msra.mxu0 0.0
    %987 = vmatprep.subr.mxu0 0.0
    %988 = vmatpush1.msra.mxu0 0.0
    %989 = vmatprep.subr.mxu0 0.0
    %990 = vmatpush1.msra.mxu0 0.0
    %991 = vmatprep.subr.mxu0 0.0
    %992 = vmatpush1.msra.mxu0 0.0
    %993 = vmatprep.mubr.f32.mxu0 0.0
    %994 = vmatmul.mubr.f32.gmra.mrb[0].mxu0 %v911
    %v995 = vpop.f32.mrb[0].mxu0
    %v996 = vadd.f32 %v928, %v995
    %v997 = vpop.f32.mrb[0].mxu0
    %998 = vdwg.mxu0
    %v999 = vld [vmem:[#allocation2 + $0xa40] sm:$0xff]
    %v1000 = vld [vmem:[#allocation2 + $0xa50] sm:$0xff]
    %v1001 = vld [vmem:[#allocation2 + $0xa60] sm:$0xff]
    %v1002 = vld [vmem:[#allocation2 + $0xa70] sm:$0xff]
    %v1003 = vld [vmem:[#allocation2 + $0xa80] sm:$0xff]
    %v1004 = vld [vmem:[#allocation2 + $0xa90] sm:$0xff]
    %v1005 = vld [vmem:[#allocation2 + $0xaa0] sm:$0xff]
    %v1006 = vld [vmem:[#allocation2 + $0xab0] sm:$0xff]
    %v1007 = vld [vmem:[#allocation2 + $0xac0] sm:$0xff]
    %v1008 = vld [vmem:[#allocation2 + $0xad0] sm:$0xff]
    %v1009 = vld [vmem:[#allocation2 + $0xae0] sm:$0xff]
    %v1010 = vld [vmem:[#allocation2 + $0xaf0] sm:$0xff]
    %v1011 = vld [vmem:[#allocation2 + $0xb00] sm:$0xff]
    %v1012 = vld [vmem:[#allocation2 + $0xb10] sm:$0xff]
    %v1013 = vld [vmem:[#allocation2 + $0xb20] sm:$0xff]
    %v1014 = vld [vmem:[#allocation2 + $0xb30] sm:$0xff]
    %v1015 = vld [vmem:[#allocation2 + $0xb50] ss:$0 sm:$0xff]
    %1016 = vmatprep.subr.mxu0 0.0
    %1017 = vmatpush1.msra.mxu0 %v999
    %1018 = vmatprep.subr.mxu0 0.0
    %1019 = vmatpush1.msra.mxu0 %v1000
    %1020 = vmatprep.subr.mxu0 0.0
    %1021 = vmatpush1.msra.mxu0 %v1001
    %1022 = vmatprep.subr.mxu0 0.0
    %1023 = vmatpush1.msra.mxu0 %v1002
    %1024 = vmatprep.subr.mxu0 0.0
    %1025 = vmatpush1.msra.mxu0 %v1003
    %1026 = vmatprep.subr.mxu0 0.0
    %1027 = vmatpush1.msra.mxu0 %v1004
    %1028 = vmatprep.subr.mxu0 0.0
    %1029 = vmatpush1.msra.mxu0 %v1005
    %1030 = vmatprep.subr.mxu0 0.0
    %1031 = vmatpush1.msra.mxu0 %v1006
    %1032 = vmatprep.subr.mxu0 0.0
    %1033 = vmatpush1.msra.mxu0 %v1007
    %1034 = vmatprep.subr.mxu0 0.0
    %1035 = vmatpush1.msra.mxu0 %v1008
    %1036 = vmatprep.subr.mxu0 0.0
    %1037 = vmatpush1.msra.mxu0 %v1009
    %1038 = vmatprep.subr.mxu0 0.0
    %1039 = vmatpush1.msra.mxu0 %v1010
    %1040 = vmatprep.subr.mxu0 0.0
    %1041 = vmatpush1.msra.mxu0 %v1011
    %1042 = vmatprep.subr.mxu0 0.0
    %1043 = vmatpush1.msra.mxu0 %v1012
    %1044 = vmatprep.subr.mxu0 0.0
    %1045 = vmatpush1.msra.mxu0 %v1013
    %1046 = vmatprep.subr.mxu0 0.0
    %1047 = vmatpush1.msra.mxu0 %v1014
    %1048 = vmatprep.subr.mxu0 0.0
    %1049 = vmatpush1.msra.mxu0 0.0
    %1050 = vmatprep.subr.mxu0 0.0
    %1051 = vmatpush1.msra.mxu0 0.0
    %1052 = vmatprep.subr.mxu0 0.0
    %1053 = vmatpush1.msra.mxu0 0.0
    %1054 = vmatprep.subr.mxu0 0.0
    %1055 = vmatpush1.msra.mxu0 0.0
    %1056 = vmatprep.subr.mxu0 0.0
    %1057 = vmatpush1.msra.mxu0 0.0
    %1058 = vmatprep.subr.mxu0 0.0
    %1059 = vmatpush1.msra.mxu0 0.0
    %1060 = vmatprep.subr.mxu0 0.0
    %1061 = vmatpush1.msra.mxu0 0.0
    %1062 = vmatprep.subr.mxu0 0.0
    %1063 = vmatpush1.msra.mxu0 0.0
    %1064 = vmatprep.subr.mxu0 0.0
    %1065 = vmatpush1.msra.mxu0 0.0
    %1066 = vmatprep.subr.mxu0 0.0
    %1067 = vmatpush1.msra.mxu0 0.0
    %1068 = vmatprep.subr.mxu0 0.0
    %1069 = vmatpush1.msra.mxu0 0.0
    %1070 = vmatprep.subr.mxu0 0.0
    %1071 = vmatpush1.msra.mxu0 0.0
    %1072 = vmatprep.subr.mxu0 0.0
    %1073 = vmatpush1.msra.mxu0 0.0
    %1074 = vmatprep.subr.mxu0 0.0
    %1075 = vmatpush1.msra.mxu0 0.0
    %1076 = vmatprep.subr.mxu0 0.0
    %1077 = vmatpush1.msra.mxu0 0.0
    %1078 = vmatprep.subr.mxu0 0.0
    %1079 = vmatpush1.msra.mxu0 0.0
    %1080 = vmatprep.mubr.f32.mxu0 0.0
    %1081 = vmatmul.mubr.f32.gmra.mrb[0].mxu0 %v911
    %v1082 = vpop.f32.mrb[0].mxu0
    %v1083 = vadd.f32 %v1015, %v1082
    %v1084 = vpop.f32.mrb[0].mxu0
    %1085 = vdwg.mxu0
    %v1086 = vmax.f32 %v996, %v1083
    %v1087 = vld [vmem:[#allocation2 + $0xb70] ss:$0 sm:$0xff]
    %v1088 = vmul.f32 %v911, %v1087
    %v1089 = vld [vmem:[#allocation2 + $0xb60] ss:$0 sm:$0xff]
    %v1090 = vadd.f32 %v1088, %v1089
    %v1091 = vmax.f32 %v1090, 0.0
    %v1092 = vld [vmem:[#allocation2 + $0x720] sm:$0xff]
    %v1093 = vld [vmem:[#allocation2 + $0x730] sm:$0xff]
    %v1094 = vld [vmem:[#allocation2 + $0x740] sm:$0xff]
    %v1095 = vld [vmem:[#allocation2 + $0x750] sm:$0xff]
    %v1096 = vld [vmem:[#allocation2 + $0x760] sm:$0xff]
    %v1097 = vld [vmem:[#allocation2 + $0x770] sm:$0xff]
    %v1098 = vld [vmem:[#allocation2 + $0x780] sm:$0xff]
    %v1099 = vld [vmem:[#allocation2 + $0x790] sm:$0xff]
    %v1100 = vld [vmem:[#allocation2 + $0x7a0] sm:$0xff]
    %v1101 = vld [vmem:[#allocation2 + $0x7b0] sm:$0xff]
    %v1102 = vld [vmem:[#allocation2 + $0x7c0] sm:$0xff]
    %v1103 = vld [vmem:[#allocation2 + $0x7d0] sm:$0xff]
    %v1104 = vld [vmem:[#allocation2 + $0x7e0] sm:$0xff]
    %v1105 = vld [vmem:[#allocation2 + $0x7f0] sm:$0xff]
    %v1106 = vld [vmem:[#allocation2 + $0x800] sm:$0xff]
    %v1107 = vld [vmem:[#allocation2 + $0x810] sm:$0xff]
    %v1108 = vld [vmem:[#allocation2 + $0x820] ss:$0 sm:$0xff]
    %1109 = vmatprep.subr.mxu0 0.0
    %1110 = vmatpush1.msra.mxu0 %v1092
    %1111 = vmatprep.subr.mxu0 0.0
    %1112 = vmatpush1.msra.mxu0 %v1093
    %1113 = vmatprep.subr.mxu0 0.0
    %1114 = vmatpush1.msra.mxu0 %v1094
    %1115 = vmatprep.subr.mxu0 0.0
    %1116 = vmatpush1.msra.mxu0 %v1095
    %1117 = vmatprep.subr.mxu0 0.0
    %1118 = vmatpush1.msra.mxu0 %v1096
    %1119 = vmatprep.subr.mxu0 0.0
    %1120 = vmatpush1.msra.mxu0 %v1097
    %1121 = vmatprep.subr.mxu0 0.0
    %1122 = vmatpush1.msra.mxu0 %v1098
    %1123 = vmatprep.subr.mxu0 0.0
    %1124 = vmatpush1.msra.mxu0 %v1099
    %1125 = vmatprep.subr.mxu0 0.0
    %1126 = vmatpush1.msra.mxu0 %v1100
    %1127 = vmatprep.subr.mxu0 0.0
    %1128 = vmatpush1.msra.mxu0 %v1101
    %1129 = vmatprep.subr.mxu0 0.0
    %1130 = vmatpush1.msra.mxu0 %v1102
    %1131 = vmatprep.subr.mxu0 0.0
    %1132 = vmatpush1.msra.mxu0 %v1103
    %1133 = vmatprep.subr.mxu0 0.0
    %1134 = vmatpush1.msra.mxu0 %v1104
    %1135 = vmatprep.subr.mxu0 0.0
    %1136 = vmatpush1.msra.mxu0 %v1105
    %1137 = vmatprep.subr.mxu0 0.0
    %1138 = vmatpush1.msra.mxu0 %v1106
    %1139 = vmatprep.subr.mxu0 0.0
    %1140 = vmatpush1.msra.mxu0 %v1107
    %1141 = vmatprep.subr.mxu0 0.0
    %1142 = vmatpush1.msra.mxu0 0.0
    %1143 = vmatprep.subr.mxu0 0.0
    %1144 = vmatpush1.msra.mxu0 0.0
    %1145 = vmatprep.subr.mxu0 0.0
    %1146 = vmatpush1.msra.mxu0 0.0
    %1147 = vmatprep.subr.mxu0 0.0
    %1148 = vmatpush1.msra.mxu0 0.0
    %1149 = vmatprep.subr.mxu0 0.0
    %1150 = vmatpush1.msra.mxu0 0.0
    %1151 = vmatprep.subr.mxu0 0.0
    %1152 = vmatpush1.msra.mxu0 0.0
    %1153 = vmatprep.subr.mxu0 0.0
    %1154 = vmatpush1.msra.mxu0 0.0
    %1155 = vmatprep.subr.mxu0 0.0
    %1156 = vmatpush1.msra.mxu0 0.0
    %1157 = vmatprep.subr.mxu0 0.0
    %1158 = vmatpush1.msra.mxu0 0.0
    %1159 = vmatprep.subr.mxu0 0.0
    %1160 = vmatpush1.msra.mxu0 0.0
    %1161 = vmatprep.subr.mxu0 0.0
    %1162 = vmatpush1.msra.mxu0 0.0
    %1163 = vmatprep.subr.mxu0 0.0
    %1164 = vmatpush1.msra.mxu0 0.0
    %1165 = vmatprep.subr.mxu0 0.0
    %1166 = vmatpush1.msra.mxu0 0.0
    %1167 = vmatprep.subr.mxu0 0.0
    %1168 = vmatpush1.msra.mxu0 0.0
    %1169 = vmatprep.subr.mxu0 0.0
    %1170 = vmatpush1.msra.mxu0 0.0
    %1171 = vmatprep.subr.mxu0 0.0
    %1172 = vmatpush1.msra.mxu0 0.0
    %1173 = vmatprep.mubr.f32.mxu0 0.0
    %1174 = vmatmul.mubr.f32.gmra.mrb[0].mxu0 %v1091
    %v1175 = vpop.f32.mrb[0].mxu0
    %v1176 = vadd.f32 %v1108, %v1175
    %v1177 = vpop.f32.mrb[0].mxu0
    %1178 = vdwg.mxu0
    %v1179 = vmax.f32 %v1176, 0.0
    %v1180 = vld [vmem:[#allocation2 + $0x830] sm:$0xff]
    %v1181 = vld [vmem:[#allocation2 + $0x840] sm:$0xff]
    %v1182 = vld [vmem:[#allocation2 + $0x850] sm:$0xff]
    %v1183 = vld [vmem:[#allocation2 + $0x860] sm:$0xff]
    %v1184 = vld [vmem:[#allocation2 + $0x870] sm:$0xff]
    %v1185 = vld [vmem:[#allocation2 + $0x880] sm:$0xff]
    %v1186 = vld [vmem:[#allocation2 + $0x890] sm:$0xff]
    %v1187 = vld [vmem:[#allocation2 + $0x8a0] sm:$0xff]
    %v1188 = vld [vmem:[#allocation2 + $0x8b0] sm:$0xff]
    %v1189 = vld [vmem:[#allocation2 + $0x8c0] sm:$0xff]
    %v1190 = vld [vmem:[#allocation2 + $0x8d0] sm:$0xff]
    %v1191 = vld [vmem:[#allocation2 + $0x8e0] sm:$0xff]
    %v1192 = vld [vmem:[#allocation2 + $0x8f0] sm:$0xff]
    %v1193 = vld [vmem:[#allocation2 + $0x900] sm:$0xff]
    %v1194 = vld [vmem:[#allocation2 + $0x910] sm:$0xff]
    %v1195 = vld [vmem:[#allocation2 + $0x920] sm:$0xff]
    %v1196 = vld [vmem:[#allocation2 + $0x930] ss:$0 sm:$0xff]
    %1197 = vmatprep.subr.mxu0 0.0
    %1198 = vmatpush1.msra.mxu0 %v1180
    %1199 = vmatprep.subr.mxu0 0.0
    %1200 = vmatpush1.msra.mxu0 %v1181
    %1201 = vmatprep.subr.mxu0 0.0
    %1202 = vmatpush1.msra.mxu0 %v1182
    %1203 = vmatprep.subr.mxu0 0.0
    %1204 = vmatpush1.msra.mxu0 %v1183
    %1205 = vmatprep.subr.mxu0 0.0
    %1206 = vmatpush1.msra.mxu0 %v1184
    %1207 = vmatprep.subr.mxu0 0.0
    %1208 = vmatpush1.msra.mxu0 %v1185
    %1209 = vmatprep.subr.mxu0 0.0
    %1210 = vmatpush1.msra.mxu0 %v1186
    %1211 = vmatprep.subr.mxu0 0.0
    %1212 = vmatpush1.msra.mxu0 %v1187
    %1213 = vmatprep.subr.mxu0 0.0
    %1214 = vmatpush1.msra.mxu0 %v1188
    %1215 = vmatprep.subr.mxu0 0.0
    %1216 = vmatpush1.msra.mxu0 %v1189
    %1217 = vmatprep.subr.mxu0 0.0
    %1218 = vmatpush1.msra.mxu0 %v1190
    %1219 = vmatprep.subr.mxu0 0.0
    %1220 = vmatpush1.msra.mxu0 %v1191
    %1221 = vmatprep.subr.mxu0 0.0
    %1222 = vmatpush1.msra.mxu0 %v1192
    %1223 = vmatprep.subr.mxu0 0.0
    %1224 = vmatpush1.msra.mxu0 %v1193
    %1225 = vmatprep.subr.mxu0 0.0
    %1226 = vmatpush1.msra.mxu0 %v1194
    %1227 = vmatprep.subr.mxu0 0.0
    %1228 = vmatpush1.msra.mxu0 %v1195
    %1229 = vmatprep.subr.mxu0 0.0
    %1230 = vmatpush1.msra.mxu0 0.0
    %1231 = vmatprep.subr.mxu0 0.0
    %1232 = vmatpush1.msra.mxu0 0.0
    %1233 = vmatprep.subr.mxu0 0.0
    %1234 = vmatpush1.msra.mxu0 0.0
    %1235 = vmatprep.subr.mxu0 0.0
    %1236 = vmatpush1.msra.mxu0 0.0
    %1237 = vmatprep.subr.mxu0 0.0
    %1238 = vmatpush1.msra.mxu0 0.0
    %1239 = vmatprep.subr.mxu0 0.0
    %1240 = vmatpush1.msra.mxu0 0.0
    %1241 = vmatprep.subr.mxu0 0.0
    %1242 = vmatpush1.msra.mxu0 0.0
    %1243 = vmatprep.subr.mxu0 0.0
    %1244 = vmatpush1.msra.mxu0 0.0
    %1245 = vmatprep.subr.mxu0 0.0
    %1246 = vmatpush1.msra.mxu0 0.0
    %1247 = vmatprep.subr.mxu0 0.0
    %1248 = vmatpush1.msra.mxu0 0.0
    %1249 = vmatprep.subr.mxu0 0.0
    %1250 = vmatpush1.msra.mxu0 0.0
    %1251 = vmatprep.subr.mxu0 0.0
    %1252 = vmatpush1.msra.mxu0 0.0
    %1253 = vmatprep.subr.mxu0 0.0
    %1254 = vmatpush1.msra.mxu0 0.0
    %1255 = vmatprep.subr.mxu0 0.0
    %1256 = vmatpush1.msra.mxu0 0.0
    %1257 = vmatprep.subr.mxu0 0.0
    %1258 = vmatpush1.msra.mxu0 0.0
    %1259 = vmatprep.subr.mxu0 0.0
    %1260 = vmatpush1.msra.mxu0 0.0
    %1261 = vmatprep.mubr.f32.mxu0 0.0
    %1262 = vmatmul.mubr.f32.gmra.mrb[0].mxu0 %v1179
    %v1263 = vpop.f32.mrb[0].mxu0
    %v1264 = vadd.f32 %v1196, %v1263
    %v1265 = vpop.f32.mrb[0].mxu0
    %1266 = vdwg.mxu0
    %v1267 = vld [vmem:[#allocation2 + $0xb80] sm:$0xff]
    %v1268 = vld [vmem:[#allocation2 + $0xb90] sm:$0xff]
    %v1269 = vld [vmem:[#allocation2 + $0xba0] sm:$0xff]
    %v1270 = vld [vmem:[#allocation2 + $0xbb0] sm:$0xff]
    %v1271 = vld [vmem:[#allocation2 + $0xbc0] sm:$0xff]
    %v1272 = vld [vmem:[#allocation2 + $0xbd0] sm:$0xff]
    %v1273 = vld [vmem:[#allocation2 + $0xbe0] sm:$0xff]
    %v1274 = vld [vmem:[#allocation2 + $0xbf0] sm:$0xff]
    %v1276 = vsel %vm35, %v1264, 0
    %1278 = vmatprep.subr.mxu0 0.0
    %1279 = vmatpush1.msra.mxu0 %v1267
    %1280 = vmatprep.subr.mxu0 0.0
    %1281 = vmatpush1.msra.mxu0 %v1268
    %1282 = vmatprep.subr.mxu0 0.0
    %1283 = vmatpush1.msra.mxu0 %v1269
    %1284 = vmatprep.subr.mxu0 0.0
    %1285 = vmatpush1.msra.mxu0 %v1270
    %1286 = vmatprep.subr.mxu0 0.0
    %1287 = vmatpush1.msra.mxu0 %v1271
    %1288 = vmatprep.subr.mxu0 0.0
    %1289 = vmatpush1.msra.mxu0 %v1272
    %1290 = vmatprep.subr.mxu0 0.0
    %1291 = vmatpush1.msra.mxu0 %v1273
    %1292 = vmatprep.subr.mxu0 0.0
    %1293 = vmatpush1.msra.mxu0 %v1274
    %1294 = vmatprep.subr.mxu0 0.0
    %1295 = vmatpush1.msra.mxu0 0.0
    %1296 = vmatprep.subr.mxu0 0.0
    %1297 = vmatpush1.msra.mxu0 0.0
    %1298 = vmatprep.subr.mxu0 0.0
    %1299 = vmatpush1.msra.mxu0 0.0
    %1300 = vmatprep.subr.mxu0 0.0
    %1301 = vmatpush1.msra.mxu0 0.0
    %1302 = vmatprep.subr.mxu0 0.0
    %1303 = vmatpush1.msra.mxu0 0.0
    %1304 = vmatprep.subr.mxu0 0.0
    %1305 = vmatpush1.msra.mxu0 0.0
    %1306 = vmatprep.subr.mxu0 0.0
    %1307 = vmatpush1.msra.mxu0 0.0
    %1308 = vmatprep.subr.mxu0 0.0
    %1309 = vmatpush1.msra.mxu0 0.0
    %1310 = vmatprep.subr.mxu0 0.0
    %1311 = vmatpush1.msra.mxu0 0.0
    %1312 = vmatprep.subr.mxu0 0.0
    %1313 = vmatpush1.msra.mxu0 0.0
    %1314 = vmatprep.subr.mxu0 0.0
    %1315 = vmatpush1.msra.mxu0 0.0
    %1316 = vmatprep.subr.mxu0 0.0
    %1317 = vmatpush1.msra.mxu0 0.0
    %1318 = vmatprep.subr.mxu0 0.0
    %1319 = vmatpush1.msra.mxu0 0.0
    %1320 = vmatprep.subr.mxu0 0.0
    %1321 = vmatpush1.msra.mxu0 0.0
    %1322 = vmatprep.subr.mxu0 0.0
    %1323 = vmatpush1.msra.mxu0 0.0
    %1324 = vmatprep.subr.mxu0 0.0
    %1325 = vmatpush1.msra.mxu0 0.0
    %1326 = vmatprep.subr.mxu0 0.0
    %1327 = vmatpush1.msra.mxu0 0.0
    %1328 = vmatprep.subr.mxu0 0.0
    %1329 = vmatpush1.msra.mxu0 0.0
    %1330 = vmatprep.subr.mxu0 0.0
    %1331 = vmatpush1.msra.mxu0 0.0
    %1332 = vmatprep.subr.mxu0 0.0
    %1333 = vmatpush1.msra.mxu0 0.0
    %1334 = vmatprep.subr.mxu0 0.0
    %1335 = vmatpush1.msra.mxu0 0.0
    %1336 = vmatprep.subr.mxu0 0.0
    %1337 = vmatpush1.msra.mxu0 0.0
    %1338 = vmatprep.subr.mxu0 0.0
    %1339 = vmatpush1.msra.mxu0 0.0
    %1340 = vmatprep.subr.mxu0 0.0
    %1341 = vmatpush1.msra.mxu0 0.0
    %1342 = vmatprep.mubr.f32.mxu0 0.0
    %1343 = vmatmul.mubr.f32.gmra.mrb[0].mxu0 %v1276
    %v1344 = vpop.f32.mrb[0].mxu0
    %v1345 = vadd.f32 0.0, %v1344
    %v1346 = vpop.f32.mrb[0].mxu0
    %1347 = vdwg.mxu0
    %v1348 = vld [vmem:[#allocation2 + $0xc20] sm:$0xff]
    %v1349 = vld [vmem:[#allocation2 + $0xc30] sm:$0xff]
    %v1351 = vsel %vm676, %v1345, 0
    %1353 = vmatprep.subr.mxu0 0.0
    %1354 = vmatpush1.msra.mxu0 %v1348
    %1355 = vmatprep.subr.mxu0 0.0
    %1356 = vmatpush1.msra.mxu0 %v1349
    %1357 = vmatprep.subr.mxu0 0.0
    %1358 = vmatpush1.msra.mxu0 0.0
    %1359 = vmatprep.subr.mxu0 0.0
    %1360 = vmatpush1.msra.mxu0 0.0
    %1361 = vmatprep.subr.mxu0 0.0
    %1362 = vmatpush1.msra.mxu0 0.0
    %1363 = vmatprep.subr.mxu0 0.0
    %1364 = vmatpush1.msra.mxu0 0.0
    %1365 = vmatprep.subr.mxu0 0.0
    %1366 = vmatpush1.msra.mxu0 0.0
    %1367 = vmatprep.subr.mxu0 0.0
    %1368 = vmatpush1.msra.mxu0 0.0
    %1369 = vmatprep.subr.mxu0 0.0
    %1370 = vmatpush1.msra.mxu0 0.0
    %1371 = vmatprep.subr.mxu0 0.0
    %1372 = vmatpush1.msra.mxu0 0.0
    %1373 = vmatprep.subr.mxu0 0.0
    %1374 = vmatpush1.msra.mxu0 0.0
    %1375 = vmatprep.subr.mxu0 0.0
    %1376 = vmatpush1.msra.mxu0 0.0
    %1377 = vmatprep.subr.mxu0 0.0
    %1378 = vmatpush1.msra.mxu0 0.0
    %1379 = vmatprep.subr.mxu0 0.0
    %1380 = vmatpush1.msra.mxu0 0.0
    %1381 = vmatprep.subr.mxu0 0.0
    %1382 = vmatpush1.msra.mxu0 0.0
    %1383 = vmatprep.subr.mxu0 0.0
    %1384 = vmatpush1.msra.mxu0 0.0
    %1385 = vmatprep.subr.mxu0 0.0
    %1386 = vmatpush1.msra.mxu0 0.0
    %1387 = vmatprep.subr.mxu0 0.0
    %1388 = vmatpush1.msra.mxu0 0.0
    %1389 = vmatprep.subr.mxu0 0.0
    %1390 = vmatpush1.msra.mxu0 0.0
    %1391 = vmatprep.subr.mxu0 0.0
    %1392 = vmatpush1.msra.mxu0 0.0
    %1393 = vmatprep.subr.mxu0 0.0
    %1394 = vmatpush1.msra.mxu0 0.0
    %1395 = vmatprep.subr.mxu0 0.0
    %1396 = vmatpush1.msra.mxu0 0.0
    %1397 = vmatprep.subr.mxu0 0.0
    %1398 = vmatpush1.msra.mxu0 0.0
    %1399 = vmatprep.subr.mxu0 0.0
    %1400 = vmatpush1.msra.mxu0 0.0
    %1401 = vmatprep.subr.mxu0 0.0
    %1402 = vmatpush1.msra.mxu0 0.0
    %1403 = vmatprep.subr.mxu0 0.0
    %1404 = vmatpush1.msra.mxu0 0.0
    %1405 = vmatprep.subr.mxu0 0.0
    %1406 = vmatpush1.msra.mxu0 0.0
    %1407 = vmatprep.subr.mxu0 0.0
    %1408 = vmatpush1.msra.mxu0 0.0
    %1409 = vmatprep.subr.mxu0 0.0
    %1410 = vmatpush1.msra.mxu0 0.0
    %1411 = vmatprep.subr.mxu0 0.0
    %1412 = vmatpush1.msra.mxu0 0.0
    %1413 = vmatprep.subr.mxu0 0.0
    %1414 = vmatpush1.msra.mxu0 0.0
    %1415 = vmatprep.subr.mxu0 0.0
    %1416 = vmatpush1.msra.mxu0 0.0
    %1417 = vmatprep.mubr.f32.mxu0 0.0
    %1418 = vmatmul.mubr.f32.gmra.mrb[0].mxu0 %v1351
    %v1419 = vpop.f32.mrb[0].mxu0
    %v1420 = vadd.f32 0.0, %v1419
    %v1421 = vpop.f32.mrb[0].mxu0
    %1422 = vdwg.mxu0
    %v1423 = vmax.f32 %v1420, 0.0
    %v1424 = vld [vmem:[#allocation2 + $0xc40] sm:$0xf]
    %v1426 = vsel %vm752, %v1423, 0
    %v1429 = vsel %vm756, %v1424, 0
    %1431 = vmatprep.subr.mxu0 0.0
    %1432 = vmatpush1.msra.mxu0 %v1429
    %1433 = vmatprep.subr.mxu0 0.0
    %1434 = vmatpush1.msra.mxu0 0.0
    %1435 = vmatprep.subr.mxu0 0.0
    %1436 = vmatpush1.msra.mxu0 0.0
    %1437 = vmatprep.subr.mxu0 0.0
    %1438 = vmatpush1.msra.mxu0 0.0
    %1439 = vmatprep.subr.mxu0 0.0
    %1440 = vmatpush1.msra.mxu0 0.0
    %1441 = vmatprep.subr.mxu0 0.0
    %1442 = vmatpush1.msra.mxu0 0.0
    %1443 = vmatprep.subr.mxu0 0.0
    %1444 = vmatpush1.msra.mxu0 0.0
    %1445 = vmatprep.subr.mxu0 0.0
    %1446 = vmatpush1.msra.mxu0 0.0
    %1447 = vmatprep.subr.mxu0 0.0
    %1448 = vmatpush1.msra.mxu0 0.0
    %1449 = vmatprep.subr.mxu0 0.0
    %1450 = vmatpush1.msra.mxu0 0.0
    %1451 = vmatprep.subr.mxu0 0.0
    %1452 = vmatpush1.msra.mxu0 0.0
    %1453 = vmatprep.subr.mxu0 0.0
    %1454 = vmatpush1.msra.mxu0 0.0
    %1455 = vmatprep.subr.mxu0 0.0
    %1456 = vmatpush1.msra.mxu0 0.0
    %1457 = vmatprep.subr.mxu0 0.0
    %1458 = vmatpush1.msra.mxu0 0.0
    %1459 = vmatprep.subr.mxu0 0.0
    %1460 = vmatpush1.msra.mxu0 0.0
    %1461 = vmatprep.subr.mxu0 0.0
    %1462 = vmatpush1.msra.mxu0 0.0
    %1463 = vmatprep.subr.mxu0 0.0
    %1464 = vmatpush1.msra.mxu0 0.0
    %1465 = vmatprep.subr.mxu0 0.0
    %1466 = vmatpush1.msra.mxu0 0.0
    %1467 = vmatprep.subr.mxu0 0.0
    %1468 = vmatpush1.msra.mxu0 0.0
    %1469 = vmatprep.subr.mxu0 0.0
    %1470 = vmatpush1.msra.mxu0 0.0
    %1471 = vmatprep.subr.mxu0 0.0
    %1472 = vmatpush1.msra.mxu0 0.0
    %1473 = vmatprep.subr.mxu0 0.0
    %1474 = vmatpush1.msra.mxu0 0.0
    %1475 = vmatprep.subr.mxu0 0.0
    %1476 = vmatpush1.msra.mxu0 0.0
    %1477 = vmatprep.subr.mxu0 0.0
    %1478 = vmatpush1.msra.mxu0 0.0
    %1479 = vmatprep.subr.mxu0 0.0
    %1480 = vmatpush1.msra.mxu0 0.0
    %1481 = vmatprep.subr.mxu0 0.0
    %1482 = vmatpush1.msra.mxu0 0.0
    %1483 = vmatprep.subr.mxu0 0.0
    %1484 = vmatpush1.msra.mxu0 0.0
    %1485 = vmatprep.subr.mxu0 0.0
    %1486 = vmatpush1.msra.mxu0 0.0
    %1487 = vmatprep.subr.mxu0 0.0
    %1488 = vmatpush1.msra.mxu0 0.0
    %1489 = vmatprep.subr.mxu0 0.0
    %1490 = vmatpush1.msra.mxu0 0.0
    %1491 = vmatprep.subr.mxu0 0.0
    %1492 = vmatpush1.msra.mxu0 0.0
    %1493 = vmatprep.subr.mxu0 0.0
    %1494 = vmatpush1.msra.mxu0 0.0
    %1495 = vmatprep.mubr.f32.mxu0 0.0
    %1496 = vmatmul.mubr.f32.gmra.mrb[0].mxu0 %v1426
    %v1497 = vpop.f32.mrb[0].mxu0
    %v1498 = vadd.f32 0.0, %v1497
    %v1499 = vpop.f32.mrb[0].mxu0
    %1500 = vdwg.mxu0
    %v1501 = vsub.f32 0.0, %v1498
    %v1502 = vmul.f32 %v1501, 1.442695
    %v1503 = vpow.pop %v1502
    %v1504 = vadd.f32 %v1503, 1.0
    %v1505 = vrcp.pop %v1504
    %v1506 = vld [vmem:[#allocation2 + $0xc00] sm:$0xff]
    %v1507 = vld [vmem:[#allocation2 + $0xc10] sm:$0xff]
    %v1509 = vsel %vm676, %v1505, 0
    %1511 = vmatprep.subr.mxu0 0.0
    %1512 = vmatpush1.msra.mxu0 %v1506
    %1513 = vmatprep.subr.mxu0 0.0
    %1514 = vmatpush1.msra.mxu0 %v1507
    %1515 = vmatprep.subr.mxu0 0.0
    %1516 = vmatpush1.msra.mxu0 0.0
    %1517 = vmatprep.subr.mxu0 0.0
    %1518 = vmatpush1.msra.mxu0 0.0
    %1519 = vmatprep.subr.mxu0 0.0
    %1520 = vmatpush1.msra.mxu0 0.0
    %1521 = vmatprep.subr.mxu0 0.0
    %1522 = vmatpush1.msra.mxu0 0.0
    %1523 = vmatprep.subr.mxu0 0.0
    %1524 = vmatpush1.msra.mxu0 0.0
    %1525 = vmatprep.subr.mxu0 0.0
    %1526 = vmatpush1.msra.mxu0 0.0
    %1527 = vmatprep.subr.mxu0 0.0
    %1528 = vmatpush1.msra.mxu0 0.0
    %1529 = vmatprep.subr.mxu0 0.0
    %1530 = vmatpush1.msra.mxu0 0.0
    %1531 = vmatprep.subr.mxu0 0.0
    %1532 = vmatpush1.msra.mxu0 0.0
    %1533 = vmatprep.subr.mxu0 0.0
    %1534 = vmatpush1.msra.mxu0 0.0
    %1535 = vmatprep.subr.mxu0 0.0
    %1536 = vmatpush1.msra.mxu0 0.0
    %1537 = vmatprep.subr.mxu0 0.0
    %1538 = vmatpush1.msra.mxu0 0.0
    %1539 = vmatprep.subr.mxu0 0.0
    %1540 = vmatpush1.msra.mxu0 0.0
    %1541 = vmatprep.subr.mxu0 0.0
    %1542 = vmatpush1.msra.mxu0 0.0
    %1543 = vmatprep.subr.mxu0 0.0
    %1544 = vmatpush1.msra.mxu0 0.0
    %1545 = vmatprep.subr.mxu0 0.0
    %1546 = vmatpush1.msra.mxu0 0.0
    %1547 = vmatprep.subr.mxu0 0.0
    %1548 = vmatpush1.msra.mxu0 0.0
    %1549 = vmatprep.subr.mxu0 0.0
    %1550 = vmatpush1.msra.mxu0 0.0
    %1551 = vmatprep.subr.mxu0 0.0
    %1552 = vmatpush1.msra.mxu0 0.0
    %1553 = vmatprep.subr.mxu0 0.0
    %1554 = vmatpush1.msra.mxu0 0.0
    %1555 = vmatprep.subr.mxu0 0.0
    %1556 = vmatpush1.msra.mxu0 0.0
    %1557 = vmatprep.subr.mxu0 0.0
    %1558 = vmatpush1.msra.mxu0 0.0
    %1559 = vmatprep.subr.mxu0 0.0
    %1560 = vmatpush1.msra.mxu0 0.0
    %1561 = vmatprep.subr.mxu0 0.0
    %1562 = vmatpush1.msra.mxu0 0.0
    %1563 = vmatprep.subr.mxu0 0.0
    %1564 = vmatpush1.msra.mxu0 0.0
    %1565 = vmatprep.subr.mxu0 0.0
    %1566 = vmatpush1.msra.mxu0 0.0
    %1567 = vmatprep.subr.mxu0 0.0
    %1568 = vmatpush1.msra.mxu0 0.0
    %1569 = vmatprep.subr.mxu0 0.0
    %1570 = vmatpush1.msra.mxu0 0.0
    %1571 = vmatprep.subr.mxu0 0.0
    %1572 = vmatpush1.msra.mxu0 0.0
    %1573 = vmatprep.subr.mxu0 0.0
    %1574 = vmatpush1.msra.mxu0 0.0
    %1575 = vmatprep.mubr.f32.mxu0 0.0
    %1576 = vmatmul.mubr.f32.gmra.mrb[0].mxu0 %v1509
    %v1577 = vpop.f32.mrb[0].mxu0
    %v1578 = vadd.f32 0.0, %v1577
    %v1579 = vpop.f32.mrb[0].mxu0
    %1580 = vdwg.mxu0
    %v1581 = vmul.f32 %v1264, %v1578
    %v1582 = vadd.f32 %v1581, %v1086
    %v1583 = vld [vmem:[#allocation2 + $0xcf0] ss:$0 sm:$0xff]
    %v1584 = vmul.f32 %v1582, %v1583
    %v1585 = vld [vmem:[#allocation2 + $0xcd0] ss:$0 sm:$0xff]
    %v1586 = vadd.f32 %v1584, %v1585
    %v1587 = vmax.f32 %v1586, 0.0
    %v1588 = vld [vmem:[#allocation2 + $0xc50] sm:$0xff]
    %v1589 = vld [vmem:[#allocation2 + $0xc60] sm:$0xff]
    %v1590 = vld [vmem:[#allocation2 + $0xc70] sm:$0xff]
    %v1591 = vld [vmem:[#allocation2 + $0xc80] sm:$0xff]
    %v1592 = vld [vmem:[#allocation2 + $0xc90] sm:$0xff]
    %v1593 = vld [vmem:[#allocation2 + $0xca0] sm:$0xff]
    %v1594 = vld [vmem:[#allocation2 + $0xcb0] sm:$0xff]
    %v1595 = vld [vmem:[#allocation2 + $0xcc0] sm:$0xff]
    %v1596 = vld [vmem:[#allocation2 + $0xce0] ss:$0 sm:$0xff]
    %v1598 = vsel %vm35, %v1587, 0
    %1600 = vmatprep.subr.mxu0 0.0
    %1601 = vmatpush1.msra.mxu0 %v1588
    %1602 = vmatprep.subr.mxu0 0.0
    %1603 = vmatpush1.msra.mxu0 %v1589
    %1604 = vmatprep.subr.mxu0 0.0
    %1605 = vmatpush1.msra.mxu0 %v1590
    %1606 = vmatprep.subr.mxu0 0.0
    %1607 = vmatpush1.msra.mxu0 %v1591
    %1608 = vmatprep.subr.mxu0 0.0
    %1609 = vmatpush1.msra.mxu0 %v1592
    %1610 = vmatprep.subr.mxu0 0.0
    %1611 = vmatpush1.msra.mxu0 %v1593
    %1612 = vmatprep.subr.mxu0 0.0
    %1613 = vmatpush1.msra.mxu0 %v1594
    %1614 = vmatprep.subr.mxu0 0.0
    %1615 = vmatpush1.msra.mxu0 %v1595
    %1616 = vmatprep.subr.mxu0 0.0
    %1617 = vmatpush1.msra.mxu0 0.0
    %1618 = vmatprep.subr.mxu0 0.0
    %1619 = vmatpush1.msra.mxu0 0.0
    %1620 = vmatprep.subr.mxu0 0.0
    %1621 = vmatpush1.msra.mxu0 0.0
    %1622 = vmatprep.subr.mxu0 0.0
    %1623 = vmatpush1.msra.mxu0 0.0
    %1624 = vmatprep.subr.mxu0 0.0
    %1625 = vmatpush1.msra.mxu0 0.0
    %1626 = vmatprep.subr.mxu0 0.0
    %1627 = vmatpush1.msra.mxu0 0.0
    %1628 = vmatprep.subr.mxu0 0.0
    %1629 = vmatpush1.msra.mxu0 0.0
    %1630 = vmatprep.subr.mxu0 0.0
    %1631 = vmatpush1.msra.mxu0 0.0
    %1632 = vmatprep.subr.mxu0 0.0
    %1633 = vmatpush1.msra.mxu0 0.0
    %1634 = vmatprep.subr.mxu0 0.0
    %1635 = vmatpush1.msra.mxu0 0.0
    %1636 = vmatprep.subr.mxu0 0.0
    %1637 = vmatpush1.msra.mxu0 0.0
    %1638 = vmatprep.subr.mxu0 0.0
    %1639 = vmatpush1.msra.mxu0 0.0
    %1640 = vmatprep.subr.mxu0 0.0
    %1641 = vmatpush1.msra.mxu0 0.0
    %1642 = vmatprep.subr.mxu0 0.0
    %1643 = vmatpush1.msra.mxu0 0.0
    %1644 = vmatprep.subr.mxu0 0.0
    %1645 = vmatpush1.msra.mxu0 0.0
    %1646 = vmatprep.subr.mxu0 0.0
    %1647 = vmatpush1.msra.mxu0 0.0
    %1648 = vmatprep.subr.mxu0 0.0
    %1649 = vmatpush1.msra.mxu0 0.0
    %1650 = vmatprep.subr.mxu0 0.0
    %1651 = vmatpush1.msra.mxu0 0.0
    %1652 = vmatprep.subr.mxu0 0.0
    %1653 = vmatpush1.msra.mxu0 0.0
    %1654 = vmatprep.subr.mxu0 0.0
    %1655 = vmatpush1.msra.mxu0 0.0
    %1656 = vmatprep.subr.mxu0 0.0
    %1657 = vmatpush1.msra.mxu0 0.0
    %1658 = vmatprep.subr.mxu0 0.0
    %1659 = vmatpush1.msra.mxu0 0.0
    %1660 = vmatprep.subr.mxu0 0.0
    %1661 = vmatpush1.msra.mxu0 0.0
    %1662 = vmatprep.subr.mxu0 0.0
    %1663 = vmatpush1.msra.mxu0 0.0
    %1664 = vmatprep.mubr.f32.mxu0 0.0
    %1665 = vmatmul.mubr.f32.gmra.mrb[0].mxu0 %v1598
    %v1666 = vpop.f32.mrb[0].mxu0
    %v1667 = vadd.f32 %v1596, %v1666
    %v1668 = vpop.f32.mrb[0].mxu0
    %1669 = vdwg.mxu0
    %1670 = vst [vmem:[%s2] sm:$0xff] %v1667
    // Predicated region
    $region14: #{forward.1} parent=1 // pred_check
      _
    $region15: #{forward.1} parent=1 // pred_check_branch
      %1672 = sbr.rel (0) target = $region17
    $region16: #{forward.1} parent=1 // pred_region
      _
    $region17: #{forward.1} parent=1 // pred_fallthru
      _
    // Predicated region
    $region18: #{forward.1} parent=1 // pred_check
      _
    $region19: #{forward.1} parent=1 // pred_check_branch
      %1674 = sbr.rel (0) target = $region21
    $region20: #{forward.1} parent=1 // pred_region
      _
    $region21: #{forward.1} parent=1 // pred_fallthru
      _
    %1675 = vsyncpa [#allocation3], 1

</llo_original>
